<compile_context>
chip_gen: v6e
topology: v6e:2x2x1
jax: 0.10.0
libtpu: 0.0.40
codegen_flags: <defaults>
</compile_context>

<pallas_src>
import functools

import jax
import jax.numpy as jnp
from jax.experimental import pallas as pl
from jax.experimental.pallas import tpu as pltpu


def _num_tensorcores():
    """Best-effort TensorCore count of the local device; default 1 (never split)."""
    try:
        d = jax.devices()[0]
        for attr in ("num_cores", "core_count"):
            n = getattr(d, attr, None)
            if n:
                return int(n)
    except Exception:
        pass
    return 1


def _vmem_capacity_bytes():
    """Best-effort VMEM capacity; conservative 64 MiB (v7x) fallback."""
    try:
        info = pltpu.get_tpu_info()
        cap = getattr(info, "vmem_capacity_bytes", None)
        if cap:
            return int(cap)
    except Exception:
        pass
    return 64 << 20


def _sigmoid(x):
    # One EUP op (tanh) instead of exp + reciprocal (two EUP ops).
    return 0.5 * jnp.tanh(0.5 * x) + 0.5


def lstm_kernel(gx_ref, whh_ref, hout_ref, h_scr, c_scr, *,
                t_chunk, h_pad, seq_len, s_pad, unroll):
    """One grid step = t_chunk recurrent LSTM steps for one batch shard.

    gx_ref  : (t_chunk, TB, 4*Hp) bf16  precomputed x_t @ W_ih^T + (b_ih+b_hh), gate-major
    whh_ref : (Hp, 4*Hp)          bf16  W_hh^T with the 4 gates (i,f,g,o) stacked along N
    hout_ref: (TB, Hp)            f32   final hidden state (written on the last chunk)
    h_scr/c_scr : (TB, Hp)        f32   recurrent state, persistent across time chunks
    """
    tc_idx = pl.program_id(1)

    @pl.when(tc_idx == 0)
    def _():
        h_scr[...] = jnp.zeros_like(h_scr)
        c_scr[...] = jnp.zeros_like(c_scr)

    masked = s_pad != seq_len  # static: only compile the tail mask when S was padded

    def step(tt, carry):
        h, c = carry                                         # (TB, Hp) f32
        gx = gx_ref[tt].astype(jnp.float32)                  # (TB, 4*Hp)
        # One fused recurrent matmul per step; weights streamed from VMEM (not
        # vreg-hoisted), bf16 operands with f32 accumulation on the MXU.
        gh = jnp.dot(h.astype(jnp.bfloat16), whh_ref[...],
                     preferred_element_type=jnp.float32)     # (TB, 4*Hp)
        g = gx + gh
        i_g = _sigmoid(g[:, 0 * h_pad:1 * h_pad])            # 128-aligned lane slices
        f_g = _sigmoid(g[:, 1 * h_pad:2 * h_pad])
        g_g = jnp.tanh(g[:, 2 * h_pad:3 * h_pad])
        o_g = _sigmoid(g[:, 3 * h_pad:4 * h_pad])
        c_new = f_g * c + i_g * g_g
        h_new = o_g * jnp.tanh(c_new)
        if masked:
            valid = (tc_idx * t_chunk + tt) < seq_len        # ragged time tail
            h_new = jnp.where(valid, h_new, h)
            c_new = jnp.where(valid, c_new, c)
        return h_new, c_new

    h, c = jax.lax.fori_loop(0, t_chunk, step, (h_scr[...], c_scr[...]),
                             unroll=unroll)
    h_scr[...] = h
    c_scr[...] = c

    # Correctness note: hout's block index is constant along the (serial) time axis,
    # so the block stays resident and is written back to HBM only after the last
    # chunk; we write it exactly once, on that last chunk.
    @pl.when(tc_idx == pl.num_programs(1) - 1)
    def _():
        hout_ref[...] = h.astype(hout_ref.dtype)


def lstm_forward(x, w_ih, w_hh, b_ih, b_hh, w_fc, b_fc, *,
                 t_chunk=None, num_cores=None):
    """x: (S, B, I) float32 (seq-first, PyTorch nn.LSTM default).
       PyTorch parameter shapes: w_ih: (4H, I), w_hh: (4H, H), b_ih/b_hh: (4H,),
       w_fc: (C, H), b_fc: (C,).  Returns (B, C) = fc(h_final)."""
    S, B, I = x.shape
    H = w_hh.shape[1]
    h_pad = ((H + 127) // 128) * 128          # lane-dense hidden size

    x = jnp.asarray(x, jnp.float32)
    w_ih = jnp.asarray(w_ih, jnp.float32)
    w_hh = jnp.asarray(w_hh, jnp.float32)

    # ---- Hoisted input projection, emitted directly gate-major (no transpose pass),
    #      zero-padded along H, shipped bf16.
    gates = jnp.einsum('sbi,ghi->sbgh', x, w_ih.reshape(4, H, I))
    gates = gates + (b_ih + b_hh).reshape(4, H)               # (S, B, 4, H)
    if h_pad != H:
        gates = jnp.pad(gates, ((0, 0), (0, 0), (0, 0), (0, h_pad - H)))
    gates = gates.reshape(S, B, 4 * h_pad).astype(jnp.bfloat16)

    # ---- Pad batch to the 8-sublane granularity.
    b_pad = ((B + 7) // 8) * 8
    if b_pad != B:
        gates = jnp.pad(gates, ((0, 0), (0, b_pad - B), (0, 0)))

    # ---- Batch shards: only split when the chip actually has >= 2 TensorCores (v7x);
    #      on single-TC v5e/v6e a split would ~double the serial recurrence.
    if num_cores is None:
        num_cores = _num_tensorcores()
    n_b = 2 if (num_cores >= 2 and b_pad % 32 == 0) else 1
    tb = b_pad // n_b

    # ---- VMEM-budget-aware time chunking (gx bf16 block is double-buffered; W_hh's
    #      default double-buffering is accounted for here as well).
    vmem_budget = (_vmem_capacity_bytes() * 3) // 4           # leave headroom
    whh_bytes = 2 * (h_pad * 4 * h_pad * 2)                   # bf16, double-buffered
    out_bytes = 2 * (tb * h_pad * 4)
    scratch_bytes = 2 * (tb * h_pad * 4)
    per_step_bytes = 2 * (tb * 4 * h_pad * 2)                 # gx per time step, 2 bufs
    if t_chunk is None:
        t_fit = (vmem_budget - whh_bytes - out_bytes - scratch_bytes) // per_step_bytes
        t_chunk = int(max(1, min(32, S, t_fit)))
    n_tc = pl.cdiv(S, t_chunk)
    s_pad = n_tc * t_chunk
    if s_pad != S:
        # Ragged tail: zero-pad time; the kernel masks the state update past S.
        gates = jnp.pad(gates, ((0, s_pad - S), (0, 0), (0, 0)))

    # ---- Recurrent weights: W_hh^T with the 4 gates stacked along the output/N dim
    #      (one fused (Hp, 4*Hp) RHS), zero-padded, bf16 for the MXU.
    w_g = jnp.zeros((4, h_pad, h_pad), jnp.float32).at[:, :H, :H].set(
        w_hh.reshape(4, H, H))
    w_fused = w_g.transpose(2, 0, 1).reshape(h_pad, 4 * h_pad).astype(jnp.bfloat16)

    # Bounded unroll when the per-step live state is large (avoids vreg spills);
    # full unroll for small tiles keeps LLO scheduling visibility.
    unroll = t_chunk if (tb * 4 * h_pad * 4) <= (256 << 10) else min(8, t_chunk)

    kernel = functools.partial(lstm_kernel, t_chunk=t_chunk, h_pad=h_pad,
                               seq_len=S, s_pad=s_pad, unroll=unroll)

    h_last = pl.pallas_call(
        kernel,
        out_shape=jax.ShapeDtypeStruct((b_pad, h_pad), jnp.float32),
        grid_spec=pltpu.PrefetchScalarGridSpec(
            num_scalar_prefetch=0,
            grid=(n_b, n_tc),
            in_specs=[
                # Precomputed input gates, chunked over time / sharded over batch.
                pl.BlockSpec((t_chunk, tb, 4 * h_pad), lambda b, t: (t, b, 0)),
                # Loop-invariant fused recurrent weights (constant block index ->
                # never re-fetched; double-buffer footprint accounted in the budget).
                pl.BlockSpec((h_pad, 4 * h_pad), lambda b, t: (0, 0)),
            ],
            out_specs=pl.BlockSpec((tb, h_pad), lambda b, t: (b, 0)),
            scratch_shapes=[
                pltpu.VMEM((tb, h_pad), jnp.float32),   # h state
                pltpu.VMEM((tb, h_pad), jnp.float32),   # c state
            ],
        ),
        compiler_params=pltpu.CompilerParams(
            dimension_semantics=("parallel", "arbitrary"),  # batch parallel, time serial
            vmem_limit_bytes=int(vmem_budget)),
    )(gates, w_fused)

    # ---- Tiny Linear head (C = 1) in the wrapper on the lane-dense hidden state.
    h_last = h_last[:B, :H]
    return h_last @ w_fc.T + b_fc


def lstm_reference(x, w_ih, w_hh, b_ih, b_hh, w_fc, b_fc):
    """Pure-JAX f32 reference matching PyTorch nn.LSTM semantics (gate order i,f,g,o)."""
    _, B, _ = x.shape
    H = w_hh.shape[1]
    h = jnp.zeros((B, H), jnp.float32)
    c = jnp.zeros((B, H), jnp.float32)

    def step(carry, x_t):
        h, c = carry
        g = x_t @ w_ih.T + b_ih + h @ w_hh.T + b_hh
        i = jax.nn.sigmoid(g[:, 0 * H:1 * H])
        f = jax.nn.sigmoid(g[:, 1 * H:2 * H])
        gg = jnp.tanh(g[:, 2 * H:3 * H])
        o = jax.nn.sigmoid(g[:, 3 * H:4 * H])
        c = f * c + i * gg
        h = o * jnp.tanh(c)
        return (h, c), None

    (h, _), _ = jax.lax.scan(step, (h, c), x)
    return h @ w_fc.T + b_fc


if __name__ == "__main__":
    # Small shapes consistent with the module: seq-first LSTM input, 1-unit head.
    S, B, I, H, C = 8, 4, 10, 32, 1

    key = jax.random.PRNGKey(0)
    ks = jax.random.split(key, 7)
    bound = 1.0 / jnp.sqrt(H)   # PyTorch-style uniform(-1/sqrt(H), 1/sqrt(H)) init

    x = jax.random.normal(ks[0], (S, B, I), jnp.float32)
    w_ih = jax.random.uniform(ks[1], (4 * H, I), jnp.float32, -bound, bound)
    w_hh = jax.random.uniform(ks[2], (4 * H, H), jnp.float32, -bound, bound)
    b_ih = jax.random.uniform(ks[3], (4 * H,), jnp.float32, -bound, bound)
    b_hh = jax.random.uniform(ks[4], (4 * H,), jnp.float32, -bound, bound)
    w_fc = jax.random.uniform(ks[5], (C, H), jnp.float32, -bound, bound)
    b_fc = jax.random.uniform(ks[6], (C,), jnp.float32, -bound, bound)

    # Run 1: default (VMEM-budget-derived single time chunk for S=8).
    out = jax.block_until_ready(lstm_forward(x, w_ih, w_hh, b_ih, b_hh, w_fc, b_fc))
    ref = lstm_reference(x, w_ih, w_hh, b_ih, b_hh, w_fc, b_fc)
    assert out.shape == (B, C), out.shape
    # bf16 MXU operands / bf16 gx with f32 accumulation -> loosened tolerance.
    assert jnp.allclose(out, ref, atol=2e-2, rtol=2e-2), (out, ref)

    # Run 2: exercise multi-chunk time grid + ragged-tail masking (S not a multiple
    # of t_chunk) on a second small problem.
    S2, B2 = 11, 2
    x2 = jax.random.normal(jax.random.PRNGKey(1), (S2, B2, I), jnp.float32)
    out2 = jax.block_until_ready(
        lstm_forward(x2, w_ih, w_hh, b_ih, b_hh, w_fc, b_fc, t_chunk=4))
    ref2 = lstm_reference(x2, w_ih, w_hh, b_ih, b_hh, w_fc, b_fc)
    assert out2.shape == (B2, C), out2.shape
    assert jnp.allclose(out2, ref2, atol=2e-2, rtol=2e-2), (out2, ref2)

    print("KERNEL_OK")
</pallas_src>

<mosaic_0001>
module attributes {stable_mosaic.version = 11 : i64} {
  func.func @lstm_kernel(%arg0: i32, %arg1: i32, %arg2: memref<8x8x512xbf16, #tpu.memory_space<vmem>>, %arg3: memref<128x512xbf16, #tpu.memory_space<vmem>>, %arg4: memref<8x128xf32, #tpu.memory_space<vmem>>, %arg5: memref<8x128xf32, #tpu.memory_space<vmem>>, %arg6: memref<8x128xf32, #tpu.memory_space<vmem>>) attributes {dimension_semantics = [#tpu.dimension_semantics<parallel>, #tpu.dimension_semantics<arbitrary>], iteration_bounds = array<i64: 1, 1>, scalar_prefetch = 0 : i64, scratch_operands = 2 : i64, tpu.core_type = #tpu.core_type<tc>, window_params = [{transform_indices = @transform_0, window_bounds = array<i64: 8, 8, 512>}, {pipeline_mode = #tpu.pipeline_mode<synchronous>, transform_indices = @transform_1, window_bounds = array<i64: 128, 512>}, {transform_indices = @transform_2, window_bounds = array<i64: 8, 128>}]} {
    %c0_i32 = arith.constant 0 : i32
    %0 = arith.cmpi eq, %arg1, %c0_i32 : i32
    %1 = arith.extui %0 : i1 to i32
    %c0_i32_0 = arith.constant 0 : i32
    %2 = arith.cmpi ne, %1, %c0_i32_0 : i32
    scf.if %2 {
      %cst_122 = arith.constant 0.000000e+00 : f32
      %322 = vector.broadcast %cst_122 : f32 to vector<8x128xf32>
      %c0_123 = arith.constant 0 : index
      %c0_124 = arith.constant 0 : index
      %323 = vector.load %arg5[%c0_123, %c0_124] : memref<8x128xf32, #tpu.memory_space<vmem>>, vector<8x128xf32>
      tpu.vector_store %arg5[%c0_123, %c0_124], %322 {strides = array<i32>} : memref<8x128xf32, #tpu.memory_space<vmem>>, vector<8x128xf32>,
      %cst_125 = arith.constant 0.000000e+00 : f32
      %324 = vector.broadcast %cst_125 : f32 to vector<8x128xf32>
      %c0_126 = arith.constant 0 : index
      %c0_127 = arith.constant 0 : index
      %325 = vector.load %arg6[%c0_126, %c0_127] : memref<8x128xf32, #tpu.memory_space<vmem>>, vector<8x128xf32>
      tpu.vector_store %arg6[%c0_126, %c0_127], %324 {strides = array<i32>} : memref<8x128xf32, #tpu.memory_space<vmem>>, vector<8x128xf32>,
    } else {
    }
    %c0 = arith.constant 0 : index
    %c0_1 = arith.constant 0 : index
    %3 = vector.load %arg5[%c0, %c0_1] : memref<8x128xf32, #tpu.memory_space<vmem>>, vector<8x128xf32>
    %c0_2 = arith.constant 0 : index
    %c0_3 = arith.constant 0 : index
    %4 = vector.load %arg6[%c0_2, %c0_3] : memref<8x128xf32, #tpu.memory_space<vmem>>, vector<8x128xf32>
    %c0_i32_4 = arith.constant 0 : i32
    %5 = arith.index_cast %c0_i32_4 : i32 to index
    %c0_5 = arith.constant 0 : index
    %c0_6 = arith.constant 0 : index
    %6 = vector.load %arg2[%5, %c0_5, %c0_6] : memref<8x8x512xbf16, #tpu.memory_space<vmem>>, vector<1x8x512xbf16>
    %7 = vector.shape_cast %6 : vector<1x8x512xbf16> to vector<8x512xbf16>
    %8 = arith.extf %7 : vector<8x512xbf16> to vector<8x512xf32>
    %9 = arith.truncf %3 : vector<8x128xf32> to vector<8x128xbf16>
    %c0_7 = arith.constant 0 : index
    %c0_8 = arith.constant 0 : index
    %10 = vector.load %arg3[%c0_7, %c0_8] : memref<128x512xbf16, #tpu.memory_space<vmem>>, vector<128x512xbf16>
    %cst = arith.constant dense<0.000000e+00> : vector<8x512xf32>
    %11 = tpu.matmul %9, %10, %cst {dimension_numbers = #tpu.dot_dimension_numbers<[1], [0], [0], [1], [0, 0, 1, 1], [], []>} : vector<8x128xbf16>, vector<128x512xbf16>, vector<8x512xf32> -> vector<8x512xf32>
    %12 = arith.addf %8, %11 : vector<8x512xf32>
    %13 = vector.extract_strided_slice %12 {offsets = [0, 0], sizes = [8, 128], strides = [1, 1]} : vector<8x512xf32> to vector<8x128xf32>
    %cst_9 = arith.constant 5.000000e-01 : f32
    %14 = vector.broadcast %cst_9 : f32 to vector<8x128xf32>
    %15 = arith.mulf %14, %13 : vector<8x128xf32>
    %16 = math.tanh %15 : vector<8x128xf32>
    %cst_10 = arith.constant 5.000000e-01 : f32
    %17 = vector.broadcast %cst_10 : f32 to vector<8x128xf32>
    %18 = arith.mulf %17, %16 : vector<8x128xf32>
    %cst_11 = arith.constant 5.000000e-01 : f32
    %19 = vector.broadcast %cst_11 : f32 to vector<8x128xf32>
    %20 = arith.addf %18, %19 : vector<8x128xf32>
    %21 = vector.extract_strided_slice %12 {offsets = [0, 128], sizes = [8, 128], strides = [1, 1]} : vector<8x512xf32> to vector<8x128xf32>
    %cst_12 = arith.constant 5.000000e-01 : f32
    %22 = vector.broadcast %cst_12 : f32 to vector<8x128xf32>
    %23 = arith.mulf %22, %21 : vector<8x128xf32>
    %24 = math.tanh %23 : vector<8x128xf32>
    %cst_13 = arith.constant 5.000000e-01 : f32
    %25 = vector.broadcast %cst_13 : f32 to vector<8x128xf32>
    %26 = arith.mulf %25, %24 : vector<8x128xf32>
    %cst_14 = arith.constant 5.000000e-01 : f32
    %27 = vector.broadcast %cst_14 : f32 to vector<8x128xf32>
    %28 = arith.addf %26, %27 : vector<8x128xf32>
    %29 = vector.extract_strided_slice %12 {offsets = [0, 256], sizes = [8, 128], strides = [1, 1]} : vector<8x512xf32> to vector<8x128xf32>
    %30 = math.tanh %29 : vector<8x128xf32>
    %31 = vector.extract_strided_slice %12 {offsets = [0, 384], sizes = [8, 128], strides = [1, 1]} : vector<8x512xf32> to vector<8x128xf32>
    %cst_15 = arith.constant 5.000000e-01 : f32
    %32 = vector.broadcast %cst_15 : f32 to vector<8x128xf32>
    %33 = arith.mulf %32, %31 : vector<8x128xf32>
    %34 = math.tanh %33 : vector<8x128xf32>
    %cst_16 = arith.constant 5.000000e-01 : f32
    %35 = vector.broadcast %cst_16 : f32 to vector<8x128xf32>
    %36 = arith.mulf %35, %34 : vector<8x128xf32>
    %cst_17 = arith.constant 5.000000e-01 : f32
    %37 = vector.broadcast %cst_17 : f32 to vector<8x128xf32>
    %38 = arith.addf %36, %37 : vector<8x128xf32>
    %39 = arith.mulf %28, %4 : vector<8x128xf32>
    %40 = arith.mulf %20, %30 : vector<8x128xf32>
    %41 = arith.addf %39, %40 : vector<8x128xf32>
    %42 = math.tanh %41 : vector<8x128xf32>
    %43 = arith.mulf %38, %42 : vector<8x128xf32>
    %c1_i32 = arith.constant 1 : i32
    %44 = arith.index_cast %c1_i32 : i32 to index
    %c0_18 = arith.constant 0 : index
    %c0_19 = arith.constant 0 : index
    %45 = vector.load %arg2[%44, %c0_18, %c0_19] : memref<8x8x512xbf16, #tpu.memory_space<vmem>>, vector<1x8x512xbf16>
    %46 = vector.shape_cast %45 : vector<1x8x512xbf16> to vector<8x512xbf16>
    %47 = arith.extf %46 : vector<8x512xbf16> to vector<8x512xf32>
    %48 = arith.truncf %43 : vector<8x128xf32> to vector<8x128xbf16>
    %c0_20 = arith.constant 0 : index
    %c0_21 = arith.constant 0 : index
    %49 = vector.load %arg3[%c0_20, %c0_21] : memref<128x512xbf16, #tpu.memory_space<vmem>>, vector<128x512xbf16>
    %cst_22 = arith.constant dense<0.000000e+00> : vector<8x512xf32>
    %50 = tpu.matmul %48, %49, %cst_22 {dimension_numbers = #tpu.dot_dimension_numbers<[1], [0], [0], [1], [0, 0, 1, 1], [], []>} : vector<8x128xbf16>, vector<128x512xbf16>, vector<8x512xf32> -> vector<8x512xf32>
    %51 = arith.addf %47, %50 : vector<8x512xf32>
    %52 = vector.extract_strided_slice %51 {offsets = [0, 0], sizes = [8, 128], strides = [1, 1]} : vector<8x512xf32> to vector<8x128xf32>
    %cst_23 = arith.constant 5.000000e-01 : f32
    %53 = vector.broadcast %cst_23 : f32 to vector<8x128xf32>
    %54 = arith.mulf %53, %52 : vector<8x128xf32>
    %55 = math.tanh %54 : vector<8x128xf32>
    %cst_24 = arith.constant 5.000000e-01 : f32
    %56 = vector.broadcast %cst_24 : f32 to vector<8x128xf32>
    %57 = arith.mulf %56, %55 : vector<8x128xf32>
    %cst_25 = arith.constant 5.000000e-01 : f32
    %58 = vector.broadcast %cst_25 : f32 to vector<8x128xf32>
    %59 = arith.addf %57, %58 : vector<8x128xf32>
    %60 = vector.extract_strided_slice %51 {offsets = [0, 128], sizes = [8, 128], strides = [1, 1]} : vector<8x512xf32> to vector<8x128xf32>
    %cst_26 = arith.constant 5.000000e-01 : f32
    %61 = vector.broadcast %cst_26 : f32 to vector<8x128xf32>
    %62 = arith.mulf %61, %60 : vector<8x128xf32>
    %63 = math.tanh %62 : vector<8x128xf32>
    %cst_27 = arith.constant 5.000000e-01 : f32
    %64 = vector.broadcast %cst_27 : f32 to vector<8x128xf32>
    %65 = arith.mulf %64, %63 : vector<8x128xf32>
    %cst_28 = arith.constant 5.000000e-01 : f32
    %66 = vector.broadcast %cst_28 : f32 to vector<8x128xf32>
    %67 = arith.addf %65, %66 : vector<8x128xf32>
    %68 = vector.extract_strided_slice %51 {offsets = [0, 256], sizes = [8, 128], strides = [1, 1]} : vector<8x512xf32> to vector<8x128xf32>
    %69 = math.tanh %68 : vector<8x128xf32>
    %70 = vector.extract_strided_slice %51 {offsets = [0, 384], sizes = [8, 128], strides = [1, 1]} : vector<8x512xf32> to vector<8x128xf32>
    %cst_29 = arith.constant 5.000000e-01 : f32
    %71 = vector.broadcast %cst_29 : f32 to vector<8x128xf32>
    %72 = arith.mulf %71, %70 : vector<8x128xf32>
    %73 = math.tanh %72 : vector<8x128xf32>
    %cst_30 = arith.constant 5.000000e-01 : f32
    %74 = vector.broadcast %cst_30 : f32 to vector<8x128xf32>
    %75 = arith.mulf %74, %73 : vector<8x128xf32>
    %cst_31 = arith.constant 5.000000e-01 : f32
    %76 = vector.broadcast %cst_31 : f32 to vector<8x128xf32>
    %77 = arith.addf %75, %76 : vector<8x128xf32>
    %78 = arith.mulf %67, %41 : vector<8x128xf32>
    %79 = arith.mulf %59, %69 : vector<8x128xf32>
    %80 = arith.addf %78, %79 : vector<8x128xf32>
    %81 = math.tanh %80 : vector<8x128xf32>
    %82 = arith.mulf %77, %81 : vector<8x128xf32>
    %c2_i32 = arith.constant 2 : i32
    %83 = arith.index_cast %c2_i32 : i32 to index
    %c0_32 = arith.constant 0 : index
    %c0_33 = arith.constant 0 : index
    %84 = vector.load %arg2[%83, %c0_32, %c0_33] : memref<8x8x512xbf16, #tpu.memory_space<vmem>>, vector<1x8x512xbf16>
    %85 = vector.shape_cast %84 : vector<1x8x512xbf16> to vector<8x512xbf16>
    %86 = arith.extf %85 : vector<8x512xbf16> to vector<8x512xf32>
    %87 = arith.truncf %82 : vector<8x128xf32> to vector<8x128xbf16>
    %c0_34 = arith.constant 0 : index
    %c0_35 = arith.constant 0 : index
    %88 = vector.load %arg3[%c0_34, %c0_35] : memref<128x512xbf16, #tpu.memory_space<vmem>>, vector<128x512xbf16>
    %cst_36 = arith.constant dense<0.000000e+00> : vector<8x512xf32>
    %89 = tpu.matmul %87, %88, %cst_36 {dimension_numbers = #tpu.dot_dimension_numbers<[1], [0], [0], [1], [0, 0, 1, 1], [], []>} : vector<8x128xbf16>, vector<128x512xbf16>, vector<8x512xf32> -> vector<8x512xf32>
    %90 = arith.addf %86, %89 : vector<8x512xf32>
    %91 = vector.extract_strided_slice %90 {offsets = [0, 0], sizes = [8, 128], strides = [1, 1]} : vector<8x512xf32> to vector<8x128xf32>
    %cst_37 = arith.constant 5.000000e-01 : f32
    %92 = vector.broadcast %cst_37 : f32 to vector<8x128xf32>
    %93 = arith.mulf %92, %91 : vector<8x128xf32>
    %94 = math.tanh %93 : vector<8x128xf32>
    %cst_38 = arith.constant 5.000000e-01 : f32
    %95 = vector.broadcast %cst_38 : f32 to vector<8x128xf32>
    %96 = arith.mulf %95, %94 : vector<8x128xf32>
    %cst_39 = arith.constant 5.000000e-01 : f32
    %97 = vector.broadcast %cst_39 : f32 to vector<8x128xf32>
    %98 = arith.addf %96, %97 : vector<8x128xf32>
    %99 = vector.extract_strided_slice %90 {offsets = [0, 128], sizes = [8, 128], strides = [1, 1]} : vector<8x512xf32> to vector<8x128xf32>
    %cst_40 = arith.constant 5.000000e-01 : f32
    %100 = vector.broadcast %cst_40 : f32 to vector<8x128xf32>
    %101 = arith.mulf %100, %99 : vector<8x128xf32>
    %102 = math.tanh %101 : vector<8x128xf32>
    %cst_41 = arith.constant 5.000000e-01 : f32
    %103 = vector.broadcast %cst_41 : f32 to vector<8x128xf32>
    %104 = arith.mulf %103, %102 : vector<8x128xf32>
    %cst_42 = arith.constant 5.000000e-01 : f32
    %105 = vector.broadcast %cst_42 : f32 to vector<8x128xf32>
    %106 = arith.addf %104, %105 : vector<8x128xf32>
    %107 = vector.extract_strided_slice %90 {offsets = [0, 256], sizes = [8, 128], strides = [1, 1]} : vector<8x512xf32> to vector<8x128xf32>
    %108 = math.tanh %107 : vector<8x128xf32>
    %109 = vector.extract_strided_slice %90 {offsets = [0, 384], sizes = [8, 128], strides = [1, 1]} : vector<8x512xf32> to vector<8x128xf32>
    %cst_43 = arith.constant 5.000000e-01 : f32
    %110 = vector.broadcast %cst_43 : f32 to vector<8x128xf32>
    %111 = arith.mulf %110, %109 : vector<8x128xf32>
    %112 = math.tanh %111 : vector<8x128xf32>
    %cst_44 = arith.constant 5.000000e-01 : f32
    %113 = vector.broadcast %cst_44 : f32 to vector<8x128xf32>
    %114 = arith.mulf %113, %112 : vector<8x128xf32>
    %cst_45 = arith.constant 5.000000e-01 : f32
    %115 = vector.broadcast %cst_45 : f32 to vector<8x128xf32>
    %116 = arith.addf %114, %115 : vector<8x128xf32>
    %117 = arith.mulf %106, %80 : vector<8x128xf32>
    %118 = arith.mulf %98, %108 : vector<8x128xf32>
    %119 = arith.addf %117, %118 : vector<8x128xf32>
    %120 = math.tanh %119 : vector<8x128xf32>
    %121 = arith.mulf %116, %120 : vector<8x128xf32>
    %c3_i32 = arith.constant 3 : i32
    %122 = arith.index_cast %c3_i32 : i32 to index
    %c0_46 = arith.constant 0 : index
    %c0_47 = arith.constant 0 : index
    %123 = vector.load %arg2[%122, %c0_46, %c0_47] : memref<8x8x512xbf16, #tpu.memory_space<vmem>>, vector<1x8x512xbf16>
    %124 = vector.shape_cast %123 : vector<1x8x512xbf16> to vector<8x512xbf16>
    %125 = arith.extf %124 : vector<8x512xbf16> to vector<8x512xf32>
    %126 = arith.truncf %121 : vector<8x128xf32> to vector<8x128xbf16>
    %c0_48 = arith.constant 0 : index
    %c0_49 = arith.constant 0 : index
    %127 = vector.load %arg3[%c0_48, %c0_49] : memref<128x512xbf16, #tpu.memory_space<vmem>>, vector<128x512xbf16>
    %cst_50 = arith.constant dense<0.000000e+00> : vector<8x512xf32>
    %128 = tpu.matmul %126, %127, %cst_50 {dimension_numbers = #tpu.dot_dimension_numbers<[1], [0], [0], [1], [0, 0, 1, 1], [], []>} : vector<8x128xbf16>, vector<128x512xbf16>, vector<8x512xf32> -> vector<8x512xf32>
    %129 = arith.addf %125, %128 : vector<8x512xf32>
    %130 = vector.extract_strided_slice %129 {offsets = [0, 0], sizes = [8, 128], strides = [1, 1]} : vector<8x512xf32> to vector<8x128xf32>
    %cst_51 = arith.constant 5.000000e-01 : f32
    %131 = vector.broadcast %cst_51 : f32 to vector<8x128xf32>
    %132 = arith.mulf %131, %130 : vector<8x128xf32>
    %133 = math.tanh %132 : vector<8x128xf32>
    %cst_52 = arith.constant 5.000000e-01 : f32
    %134 = vector.broadcast %cst_52 : f32 to vector<8x128xf32>
    %135 = arith.mulf %134, %133 : vector<8x128xf32>
    %cst_53 = arith.constant 5.000000e-01 : f32
    %136 = vector.broadcast %cst_53 : f32 to vector<8x128xf32>
    %137 = arith.addf %135, %136 : vector<8x128xf32>
    %138 = vector.extract_strided_slice %129 {offsets = [0, 128], sizes = [8, 128], strides = [1, 1]} : vector<8x512xf32> to vector<8x128xf32>
    %cst_54 = arith.constant 5.000000e-01 : f32
    %139 = vector.broadcast %cst_54 : f32 to vector<8x128xf32>
    %140 = arith.mulf %139, %138 : vector<8x128xf32>
    %141 = math.tanh %140 : vector<8x128xf32>
    %cst_55 = arith.constant 5.000000e-01 : f32
    %142 = vector.broadcast %cst_55 : f32 to vector<8x128xf32>
    %143 = arith.mulf %142, %141 : vector<8x128xf32>
    %cst_56 = arith.constant 5.000000e-01 : f32
    %144 = vector.broadcast %cst_56 : f32 to vector<8x128xf32>
    %145 = arith.addf %143, %144 : vector<8x128xf32>
    %146 = vector.extract_strided_slice %129 {offsets = [0, 256], sizes = [8, 128], strides = [1, 1]} : vector<8x512xf32> to vector<8x128xf32>
    %147 = math.tanh %146 : vector<8x128xf32>
    %148 = vector.extract_strided_slice %129 {offsets = [0, 384], sizes = [8, 128], strides = [1, 1]} : vector<8x512xf32> to vector<8x128xf32>
    %cst_57 = arith.constant 5.000000e-01 : f32
    %149 = vector.broadcast %cst_57 : f32 to vector<8x128xf32>
    %150 = arith.mulf %149, %148 : vector<8x128xf32>
    %151 = math.tanh %150 : vector<8x128xf32>
    %cst_58 = arith.constant 5.000000e-01 : f32
    %152 = vector.broadcast %cst_58 : f32 to vector<8x128xf32>
    %153 = arith.mulf %152, %151 : vector<8x128xf32>
    %cst_59 = arith.constant 5.000000e-01 : f32
    %154 = vector.broadcast %cst_59 : f32 to vector<8x128xf32>
    %155 = arith.addf %153, %154 : vector<8x128xf32>
    %156 = arith.mulf %145, %119 : vector<8x128xf32>
    %157 = arith.mulf %137, %147 : vector<8x128xf32>
    %158 = arith.addf %156, %157 : vector<8x128xf32>
    %159 = math.tanh %158 : vector<8x128xf32>
    %160 = arith.mulf %155, %159 : vector<8x128xf32>
    %c4_i32 = arith.constant 4 : i32
    %161 = arith.index_cast %c4_i32 : i32 to index
    %c0_60 = arith.constant 0 : index
    %c0_61 = arith.constant 0 : index
    %162 = vector.load %arg2[%161, %c0_60, %c0_61] : memref<8x8x512xbf16, #tpu.memory_space<vmem>>, vector<1x8x512xbf16>
    %163 = vector.shape_cast %162 : vector<1x8x512xbf16> to vector<8x512xbf16>
    %164 = arith.extf %163 : vector<8x512xbf16> to vector<8x512xf32>
    %165 = arith.truncf %160 : vector<8x128xf32> to vector<8x128xbf16>
    %c0_62 = arith.constant 0 : index
    %c0_63 = arith.constant 0 : index
    %166 = vector.load %arg3[%c0_62, %c0_63] : memref<128x512xbf16, #tpu.memory_space<vmem>>, vector<128x512xbf16>
    %cst_64 = arith.constant dense<0.000000e+00> : vector<8x512xf32>
    %167 = tpu.matmul %165, %166, %cst_64 {dimension_numbers = #tpu.dot_dimension_numbers<[1], [0], [0], [1], [0, 0, 1, 1], [], []>} : vector<8x128xbf16>, vector<128x512xbf16>, vector<8x512xf32> -> vector<8x512xf32>
    %168 = arith.addf %164, %167 : vector<8x512xf32>
    %169 = vector.extract_strided_slice %168 {offsets = [0, 0], sizes = [8, 128], strides = [1, 1]} : vector<8x512xf32> to vector<8x128xf32>
    %cst_65 = arith.constant 5.000000e-01 : f32
    %170 = vector.broadcast %cst_65 : f32 to vector<8x128xf32>
    %171 = arith.mulf %170, %169 : vector<8x128xf32>
    %172 = math.tanh %171 : vector<8x128xf32>
    %cst_66 = arith.constant 5.000000e-01 : f32
    %173 = vector.broadcast %cst_66 : f32 to vector<8x128xf32>
    %174 = arith.mulf %173, %172 : vector<8x128xf32>
    %cst_67 = arith.constant 5.000000e-01 : f32
    %175 = vector.broadcast %cst_67 : f32 to vector<8x128xf32>
    %176 = arith.addf %174, %175 : vector<8x128xf32>
    %177 = vector.extract_strided_slice %168 {offsets = [0, 128], sizes = [8, 128], strides = [1, 1]} : vector<8x512xf32> to vector<8x128xf32>
    %cst_68 = arith.constant 5.000000e-01 : f32
    %178 = vector.broadcast %cst_68 : f32 to vector<8x128xf32>
    %179 = arith.mulf %178, %177 : vector<8x128xf32>
    %180 = math.tanh %179 : vector<8x128xf32>
    %cst_69 = arith.constant 5.000000e-01 : f32
    %181 = vector.broadcast %cst_69 : f32 to vector<8x128xf32>
    %182 = arith.mulf %181, %180 : vector<8x128xf32>
    %cst_70 = arith.constant 5.000000e-01 : f32
    %183 = vector.broadcast %cst_70 : f32 to vector<8x128xf32>
    %184 = arith.addf %182, %183 : vector<8x128xf32>
    %185 = vector.extract_strided_slice %168 {offsets = [0, 256], sizes = [8, 128], strides = [1, 1]} : vector<8x512xf32> to vector<8x128xf32>
    %186 = math.tanh %185 : vector<8x128xf32>
    %187 = vector.extract_strided_slice %168 {offsets = [0, 384], sizes = [8, 128], strides = [1, 1]} : vector<8x512xf32> to vector<8x128xf32>
    %cst_71 = arith.constant 5.000000e-01 : f32
    %188 = vector.broadcast %cst_71 : f32 to vector<8x128xf32>
    %189 = arith.mulf %188, %187 : vector<8x128xf32>
    %190 = math.tanh %189 : vector<8x128xf32>
    %cst_72 = arith.constant 5.000000e-01 : f32
    %191 = vector.broadcast %cst_72 : f32 to vector<8x128xf32>
    %192 = arith.mulf %191, %190 : vector<8x128xf32>
    %cst_73 = arith.constant 5.000000e-01 : f32
    %193 = vector.broadcast %cst_73 : f32 to vector<8x128xf32>
    %194 = arith.addf %192, %193 : vector<8x128xf32>
    %195 = arith.mulf %184, %158 : vector<8x128xf32>
    %196 = arith.mulf %176, %186 : vector<8x128xf32>
    %197 = arith.addf %195, %196 : vector<8x128xf32>
    %198 = math.tanh %197 : vector<8x128xf32>
    %199 = arith.mulf %194, %198 : vector<8x128xf32>
    %c5_i32 = arith.constant 5 : i32
    %200 = arith.index_cast %c5_i32 : i32 to index
    %c0_74 = arith.constant 0 : index
    %c0_75 = arith.constant 0 : index
    %201 = vector.load %arg2[%200, %c0_74, %c0_75] : memref<8x8x512xbf16, #tpu.memory_space<vmem>>, vector<1x8x512xbf16>
    %202 = vector.shape_cast %201 : vector<1x8x512xbf16> to vector<8x512xbf16>
    %203 = arith.extf %202 : vector<8x512xbf16> to vector<8x512xf32>
    %204 = arith.truncf %199 : vector<8x128xf32> to vector<8x128xbf16>
    %c0_76 = arith.constant 0 : index
    %c0_77 = arith.constant 0 : index
    %205 = vector.load %arg3[%c0_76, %c0_77] : memref<128x512xbf16, #tpu.memory_space<vmem>>, vector<128x512xbf16>
    %cst_78 = arith.constant dense<0.000000e+00> : vector<8x512xf32>
    %206 = tpu.matmul %204, %205, %cst_78 {dimension_numbers = #tpu.dot_dimension_numbers<[1], [0], [0], [1], [0, 0, 1, 1], [], []>} : vector<8x128xbf16>, vector<128x512xbf16>, vector<8x512xf32> -> vector<8x512xf32>
    %207 = arith.addf %203, %206 : vector<8x512xf32>
    %208 = vector.extract_strided_slice %207 {offsets = [0, 0], sizes = [8, 128], strides = [1, 1]} : vector<8x512xf32> to vector<8x128xf32>
    %cst_79 = arith.constant 5.000000e-01 : f32
    %209 = vector.broadcast %cst_79 : f32 to vector<8x128xf32>
    %210 = arith.mulf %209, %208 : vector<8x128xf32>
    %211 = math.tanh %210 : vector<8x128xf32>
    %cst_80 = arith.constant 5.000000e-01 : f32
    %212 = vector.broadcast %cst_80 : f32 to vector<8x128xf32>
    %213 = arith.mulf %212, %211 : vector<8x128xf32>
    %cst_81 = arith.constant 5.000000e-01 : f32
    %214 = vector.broadcast %cst_81 : f32 to vector<8x128xf32>
    %215 = arith.addf %213, %214 : vector<8x128xf32>
    %216 = vector.extract_strided_slice %207 {offsets = [0, 128], sizes = [8, 128], strides = [1, 1]} : vector<8x512xf32> to vector<8x128xf32>
    %cst_82 = arith.constant 5.000000e-01 : f32
    %217 = vector.broadcast %cst_82 : f32 to vector<8x128xf32>
    %218 = arith.mulf %217, %216 : vector<8x128xf32>
    %219 = math.tanh %218 : vector<8x128xf32>
    %cst_83 = arith.constant 5.000000e-01 : f32
    %220 = vector.broadcast %cst_83 : f32 to vector<8x128xf32>
    %221 = arith.mulf %220, %219 : vector<8x128xf32>
    %cst_84 = arith.constant 5.000000e-01 : f32
    %222 = vector.broadcast %cst_84 : f32 to vector<8x128xf32>
    %223 = arith.addf %221, %222 : vector<8x128xf32>
    %224 = vector.extract_strided_slice %207 {offsets = [0, 256], sizes = [8, 128], strides = [1, 1]} : vector<8x512xf32> to vector<8x128xf32>
    %225 = math.tanh %224 : vector<8x128xf32>
    %226 = vector.extract_strided_slice %207 {offsets = [0, 384], sizes = [8, 128], strides = [1, 1]} : vector<8x512xf32> to vector<8x128xf32>
    %cst_85 = arith.constant 5.000000e-01 : f32
    %227 = vector.broadcast %cst_85 : f32 to vector<8x128xf32>
    %228 = arith.mulf %227, %226 : vector<8x128xf32>
    %229 = math.tanh %228 : vector<8x128xf32>
    %cst_86 = arith.constant 5.000000e-01 : f32
    %230 = vector.broadcast %cst_86 : f32 to vector<8x128xf32>
    %231 = arith.mulf %230, %229 : vector<8x128xf32>
    %cst_87 = arith.constant 5.000000e-01 : f32
    %232 = vector.broadcast %cst_87 : f32 to vector<8x128xf32>
    %233 = arith.addf %231, %232 : vector<8x128xf32>
    %234 = arith.mulf %223, %197 : vector<8x128xf32>
    %235 = arith.mulf %215, %225 : vector<8x128xf32>
    %236 = arith.addf %234, %235 : vector<8x128xf32>
    %237 = math.tanh %236 : vector<8x128xf32>
    %238 = arith.mulf %233, %237 : vector<8x128xf32>
    %c6_i32 = arith.constant 6 : i32
    %239 = arith.index_cast %c6_i32 : i32 to index
    %c0_88 = arith.constant 0 : index
    %c0_89 = arith.constant 0 : index
    %240 = vector.load %arg2[%239, %c0_88, %c0_89] : memref<8x8x512xbf16, #tpu.memory_space<vmem>>, vector<1x8x512xbf16>
    %241 = vector.shape_cast %240 : vector<1x8x512xbf16> to vector<8x512xbf16>
    %242 = arith.extf %241 : vector<8x512xbf16> to vector<8x512xf32>
    %243 = arith.truncf %238 : vector<8x128xf32> to vector<8x128xbf16>
    %c0_90 = arith.constant 0 : index
    %c0_91 = arith.constant 0 : index
    %244 = vector.load %arg3[%c0_90, %c0_91] : memref<128x512xbf16, #tpu.memory_space<vmem>>, vector<128x512xbf16>
    %cst_92 = arith.constant dense<0.000000e+00> : vector<8x512xf32>
    %245 = tpu.matmul %243, %244, %cst_92 {dimension_numbers = #tpu.dot_dimension_numbers<[1], [0], [0], [1], [0, 0, 1, 1], [], []>} : vector<8x128xbf16>, vector<128x512xbf16>, vector<8x512xf32> -> vector<8x512xf32>
    %246 = arith.addf %242, %245 : vector<8x512xf32>
    %247 = vector.extract_strided_slice %246 {offsets = [0, 0], sizes = [8, 128], strides = [1, 1]} : vector<8x512xf32> to vector<8x128xf32>
    %cst_93 = arith.constant 5.000000e-01 : f32
    %248 = vector.broadcast %cst_93 : f32 to vector<8x128xf32>
    %249 = arith.mulf %248, %247 : vector<8x128xf32>
    %250 = math.tanh %249 : vector<8x128xf32>
    %cst_94 = arith.constant 5.000000e-01 : f32
    %251 = vector.broadcast %cst_94 : f32 to vector<8x128xf32>
    %252 = arith.mulf %251, %250 : vector<8x128xf32>
    %cst_95 = arith.constant 5.000000e-01 : f32
    %253 = vector.broadcast %cst_95 : f32 to vector<8x128xf32>
    %254 = arith.addf %252, %253 : vector<8x128xf32>
    %255 = vector.extract_strided_slice %246 {offsets = [0, 128], sizes = [8, 128], strides = [1, 1]} : vector<8x512xf32> to vector<8x128xf32>
    %cst_96 = arith.constant 5.000000e-01 : f32
    %256 = vector.broadcast %cst_96 : f32 to vector<8x128xf32>
    %257 = arith.mulf %256, %255 : vector<8x128xf32>
    %258 = math.tanh %257 : vector<8x128xf32>
    %cst_97 = arith.constant 5.000000e-01 : f32
    %259 = vector.broadcast %cst_97 : f32 to vector<8x128xf32>
    %260 = arith.mulf %259, %258 : vector<8x128xf32>
    %cst_98 = arith.constant 5.000000e-01 : f32
    %261 = vector.broadcast %cst_98 : f32 to vector<8x128xf32>
    %262 = arith.addf %260, %261 : vector<8x128xf32>
    %263 = vector.extract_strided_slice %246 {offsets = [0, 256], sizes = [8, 128], strides = [1, 1]} : vector<8x512xf32> to vector<8x128xf32>
    %264 = math.tanh %263 : vector<8x128xf32>
    %265 = vector.extract_strided_slice %246 {offsets = [0, 384], sizes = [8, 128], strides = [1, 1]} : vector<8x512xf32> to vector<8x128xf32>
    %cst_99 = arith.constant 5.000000e-01 : f32
    %266 = vector.broadcast %cst_99 : f32 to vector<8x128xf32>
    %267 = arith.mulf %266, %265 : vector<8x128xf32>
    %268 = math.tanh %267 : vector<8x128xf32>
    %cst_100 = arith.constant 5.000000e-01 : f32
    %269 = vector.broadcast %cst_100 : f32 to vector<8x128xf32>
    %270 = arith.mulf %269, %268 : vector<8x128xf32>
    %cst_101 = arith.constant 5.000000e-01 : f32
    %271 = vector.broadcast %cst_101 : f32 to vector<8x128xf32>
    %272 = arith.addf %270, %271 : vector<8x128xf32>
    %273 = arith.mulf %262, %236 : vector<8x128xf32>
    %274 = arith.mulf %254, %264 : vector<8x128xf32>
    %275 = arith.addf %273, %274 : vector<8x128xf32>
    %276 = math.tanh %275 : vector<8x128xf32>
    %277 = arith.mulf %272, %276 : vector<8x128xf32>
    %c7_i32 = arith.constant 7 : i32
    %278 = arith.index_cast %c7_i32 : i32 to index
    %c0_102 = arith.constant 0 : index
    %c0_103 = arith.constant 0 : index
    %279 = vector.load %arg2[%278, %c0_102, %c0_103] : memref<8x8x512xbf16, #tpu.memory_space<vmem>>, vector<1x8x512xbf16>
    %280 = vector.shape_cast %279 : vector<1x8x512xbf16> to vector<8x512xbf16>
    %281 = arith.extf %280 : vector<8x512xbf16> to vector<8x512xf32>
    %282 = arith.truncf %277 : vector<8x128xf32> to vector<8x128xbf16>
    %c0_104 = arith.constant 0 : index
    %c0_105 = arith.constant 0 : index
    %283 = vector.load %arg3[%c0_104, %c0_105] : memref<128x512xbf16, #tpu.memory_space<vmem>>, vector<128x512xbf16>
    %cst_106 = arith.constant dense<0.000000e+00> : vector<8x512xf32>
    %284 = tpu.matmul %282, %283, %cst_106 {dimension_numbers = #tpu.dot_dimension_numbers<[1], [0], [0], [1], [0, 0, 1, 1], [], []>} : vector<8x128xbf16>, vector<128x512xbf16>, vector<8x512xf32> -> vector<8x512xf32>
    %285 = arith.addf %281, %284 : vector<8x512xf32>
    %286 = vector.extract_strided_slice %285 {offsets = [0, 0], sizes = [8, 128], strides = [1, 1]} : vector<8x512xf32> to vector<8x128xf32>
    %cst_107 = arith.constant 5.000000e-01 : f32
    %287 = vector.broadcast %cst_107 : f32 to vector<8x128xf32>
    %288 = arith.mulf %287, %286 : vector<8x128xf32>
    %289 = math.tanh %288 : vector<8x128xf32>
    %cst_108 = arith.constant 5.000000e-01 : f32
    %290 = vector.broadcast %cst_108 : f32 to vector<8x128xf32>
    %291 = arith.mulf %290, %289 : vector<8x128xf32>
    %cst_109 = arith.constant 5.000000e-01 : f32
    %292 = vector.broadcast %cst_109 : f32 to vector<8x128xf32>
    %293 = arith.addf %291, %292 : vector<8x128xf32>
    %294 = vector.extract_strided_slice %285 {offsets = [0, 128], sizes = [8, 128], strides = [1, 1]} : vector<8x512xf32> to vector<8x128xf32>
    %cst_110 = arith.constant 5.000000e-01 : f32
    %295 = vector.broadcast %cst_110 : f32 to vector<8x128xf32>
    %296 = arith.mulf %295, %294 : vector<8x128xf32>
    %297 = math.tanh %296 : vector<8x128xf32>
    %cst_111 = arith.constant 5.000000e-01 : f32
    %298 = vector.broadcast %cst_111 : f32 to vector<8x128xf32>
    %299 = arith.mulf %298, %297 : vector<8x128xf32>
    %cst_112 = arith.constant 5.000000e-01 : f32
    %300 = vector.broadcast %cst_112 : f32 to vector<8x128xf32>
    %301 = arith.addf %299, %300 : vector<8x128xf32>
    %302 = vector.extract_strided_slice %285 {offsets = [0, 256], sizes = [8, 128], strides = [1, 1]} : vector<8x512xf32> to vector<8x128xf32>
    %303 = math.tanh %302 : vector<8x128xf32>
    %304 = vector.extract_strided_slice %285 {offsets = [0, 384], sizes = [8, 128], strides = [1, 1]} : vector<8x512xf32> to vector<8x128xf32>
    %cst_113 = arith.constant 5.000000e-01 : f32
    %305 = vector.broadcast %cst_113 : f32 to vector<8x128xf32>
    %306 = arith.mulf %305, %304 : vector<8x128xf32>
    %307 = math.tanh %306 : vector<8x128xf32>
    %cst_114 = arith.constant 5.000000e-01 : f32
    %308 = vector.broadcast %cst_114 : f32 to vector<8x128xf32>
    %309 = arith.mulf %308, %307 : vector<8x128xf32>
    %cst_115 = arith.constant 5.000000e-01 : f32
    %310 = vector.broadcast %cst_115 : f32 to vector<8x128xf32>
    %311 = arith.addf %309, %310 : vector<8x128xf32>
    %312 = arith.mulf %301, %275 : vector<8x128xf32>
    %313 = arith.mulf %293, %303 : vector<8x128xf32>
    %314 = arith.addf %312, %313 : vector<8x128xf32>
    %315 = math.tanh %314 : vector<8x128xf32>
    %316 = arith.mulf %311, %315 : vector<8x128xf32>
    %c8_i32 = arith.constant 8 : i32
    %c0_116 = arith.constant 0 : index
    %c0_117 = arith.constant 0 : index
    %317 = vector.load %arg5[%c0_116, %c0_117] : memref<8x128xf32, #tpu.memory_space<vmem>>, vector<8x128xf32>
    tpu.vector_store %arg5[%c0_116, %c0_117], %316 {strides = array<i32>} : memref<8x128xf32, #tpu.memory_space<vmem>>, vector<8x128xf32>,
    %c0_118 = arith.constant 0 : index
    %c0_119 = arith.constant 0 : index
    %318 = vector.load %arg6[%c0_118, %c0_119] : memref<8x128xf32, #tpu.memory_space<vmem>>, vector<8x128xf32>
    tpu.vector_store %arg6[%c0_118, %c0_119], %314 {strides = array<i32>} : memref<8x128xf32, #tpu.memory_space<vmem>>, vector<8x128xf32>,
    %c0_i32_120 = arith.constant 0 : i32
    %319 = arith.cmpi eq, %arg1, %c0_i32_120 : i32
    %320 = arith.extui %319 : i1 to i32
    %c0_i32_121 = arith.constant 0 : i32
    %321 = arith.cmpi ne, %320, %c0_i32_121 : i32
    scf.if %321 {
      %c0_122 = arith.constant 0 : index
      %c0_123 = arith.constant 0 : index
      %322 = vector.load %arg4[%c0_122, %c0_123] : memref<8x128xf32, #tpu.memory_space<vmem>>, vector<8x128xf32>
      tpu.vector_store %arg4[%c0_122, %c0_123], %316 {strides = array<i32>} : memref<8x128xf32, #tpu.memory_space<vmem>>, vector<8x128xf32>,
    } else {
    }
    return
  }
  func.func @transform_0(%arg0: i32, %arg1: i32) -> (i32, i32, i32) {
    %c0_i32 = arith.constant 0 : i32
    %c0_i32_0 = arith.constant 0 : i32
    return %arg1, %arg0, %c0_i32 : i32, i32, i32
  }
  func.func @transform_1(%arg0: i32, %arg1: i32) -> (i32, i32) {
    %c0_i32 = arith.constant 0 : i32
    %c0_i32_0 = arith.constant 0 : i32
    %c0_i32_1 = arith.constant 0 : i32
    return %c0_i32, %c0_i32_0 : i32, i32
  }
  func.func @transform_2(%arg0: i32, %arg1: i32) -> (i32, i32) {
    %c0_i32 = arith.constant 0 : i32
    %c0_i32_0 = arith.constant 0 : i32
    return %arg0, %c0_i32 : i32, i32
  }
}

</mosaic_0001>

<llo_original>
// kernel: tpu_custom_call.1
$region0: #{tpu_custom_call.1}
  #allocation0 [shape = 'u32[]', space=smem, size = 0x4, offset = 0x4, fixed_abs, tag = 'smem constant byte address 0x4 - core index']
  #allocation1 [shape = 'u32[144,128]{1,0:T(1,128)}', space=vmem, size = 0x12000, scoped, tag = 'internal scratch']
  #allocation2 [shape = 'f32[8,128]{1,0:T(8,128)}', space=vmem, size = 0x1000, scoped, tag = 'scratch operand']
  #allocation3 [shape = 'f32[8,128]{1,0:T(8,128)}', space=vmem, size = 0x1000, scoped, tag = 'scratch operand']
  %s0 = inlined_call_operand.hbm [shape: bf16[8,8,512], index: 0, kind: input, shape index: {}]
  %s1 = inlined_call_operand.hbm [shape: bf16[128,512], index: 1, kind: input, shape index: {}]
  %s2 = inlined_call_operand.hbm [shape: f32[8,128], index: 2, kind: output, shape index: {}]
  %s3 = sld [smem:[#allocation0]]
  $region34: #{tpu_custom_call.1} parent=0
    _
  %s5 = ssub.s32 1, %s3
  %s6 = scalar_select 0, %s5, %s3
  $region1: #{tpu_custom_call.1} parent=0
    #allocation4 [shape = 'u8[65536]{0}', space=vmem, size = 0x10000, scoped, tag = 'input window, operand 0, single buffered']
    #allocation5 [shape = 's32[1]{0}', space=sflag, size = 0x4, scoped, tag = 'scoped memory for tpu_custom_call.1']
    #allocation6 [shape = 's32[1]{0}', space=sflag, size = 0x4, scoped, tag = 'scoped memory for tpu_custom_call.1']
    #allocation7 [shape = 'u8[131072]{0}', space=vmem, size = 0x20000, scoped, tag = 'input window, operand 1, single buffered']
    #allocation8 [shape = 's32[1]{0}', space=sflag, size = 0x4, scoped, tag = 'scoped memory for tpu_custom_call.1']
    #allocation9 [shape = 'u8[4096]{0}', space=vmem, size = 0x1000, scoped, tag = 'output window, operand 0, single buffered']
    %7 = vsyncpa [#allocation5], 0
    %8 = vsyncpa [#allocation8], 0
    %9 = vsyncpa [#allocation6], 0
    // Predicated region
    $region2: #{tpu_custom_call.1} parent=1 // pred_check
      _
    $region3: #{tpu_custom_call.1} parent=1 // pred_check_branch
      %11 = sbr.rel (0) target = $region5
    $region4: #{tpu_custom_call.1} parent=1 // pred_region
      %s13 = ssub.s32 2048, 2048
      %14 = vsyncadd [#allocation5], %s13
      %s15 = sshll.u32 [#allocation4], 4
      %s16 = int_to_ptr.vmem [resolvable:$true] %s15
      %21 = dma.hbm_to_vmem [thread:$0]  %s0, 2048, %s16, [#allocation5], 256, 256, 16
    $region5: #{tpu_custom_call.1} parent=1 // pred_fallthru
      _
    // Predicated region
    $region6: #{tpu_custom_call.1} parent=1 // pred_check
      _
    $region7: #{tpu_custom_call.1} parent=1 // pred_check_branch
      %23 = sbr.rel (0) target = $region9
    $region8: #{tpu_custom_call.1} parent=1 // pred_region
      %s25 = ssub.s32 4096, 4096
      %26 = vsyncadd [#allocation8], %s25
      %s27 = sshll.u32 [#allocation7], 4
      %s28 = int_to_ptr.vmem [resolvable:$true] %s27
      %33 = dma.hbm_to_vmem [thread:$0]  %s1, 4096, %s28, [#allocation8], 256, 256, 16
    $region9: #{tpu_custom_call.1} parent=1 // pred_fallthru
      _
    // Predicated region
    $region10: #{tpu_custom_call.1} parent=1 // pred_check
      _
    $region11: #{tpu_custom_call.1} parent=1 // pred_check_branch
      %35 = sbr.rel (0) target = $region13
    $region12: #{tpu_custom_call.1} parent=1 // pred_region
      %36 = dma.done [#allocation5], 2048
    $region13: #{tpu_custom_call.1} parent=1 // pred_fallthru
      _
    // Predicated region
    $region14: #{tpu_custom_call.1} parent=1 // pred_check
      _
    $region15: #{tpu_custom_call.1} parent=1 // pred_check_branch
      %38 = sbr.rel (0) target = $region17
    $region16: #{tpu_custom_call.1} parent=1 // pred_region
      %39 = dma.done [#allocation8], 4096
    $region17: #{tpu_custom_call.1} parent=1 // pred_fallthru
      _
    %p41 = scmp.eq.s32.totalorder 0, 0
    // Predicated region
    $region18: #{tpu_custom_call.1} parent=1 // pred_check
      %p42 = pneg %p41
    $region19: #{tpu_custom_call.1} parent=1 // pred_check_branch
      %44 = sbr.rel (%p42) target = $region21
    $region20: #{tpu_custom_call.1} parent=1 // pred_region
      %45 = vst [vmem:[#allocation2] sm:$0xff] 0.0
      %46 = vst [vmem:[#allocation3] sm:$0xff] 0.0
    $region21: #{tpu_custom_call.1} parent=1 // pred_fallthru
      _
    %v47 = vld [vmem:[#allocation2] sm:$0xff]
    %v48 = vld [vmem:[#allocation3] sm:$0xff]
    %v49 = vld [vmem:[#allocation4] sm:$0xff]
    %v50 = vld [vmem:[#allocation4 + $0x8] sm:$0xff]
    %v51 = vunpack.c.l.bf16 %v49
    %v52 = vunpack.c.h.bf16 %v49
    %v53 = vunpack.c.l.bf16 %v50
    %v54 = vunpack.c.h.bf16 %v50
    %v55 = vpack.c.bf16 %v47, %v47
    %v56 = vld [vmem:[#allocation7] sm:$0xff]
    %v57 = vld [vmem:[#allocation7 + $0x8] sm:$0xff]
    %v58 = vld [vmem:[#allocation7 + $0x10] sm:$0xff]
    %v59 = vld [vmem:[#allocation7 + $0x18] sm:$0xff]
    %v60 = vld [vmem:[#allocation7 + $0x20] sm:$0xff]
    %v61 = vld [vmem:[#allocation7 + $0x28] sm:$0xff]
    %v62 = vld [vmem:[#allocation7 + $0x30] sm:$0xff]
    %v63 = vld [vmem:[#allocation7 + $0x38] sm:$0xff]
    %v64 = vld [vmem:[#allocation7 + $0x40] sm:$0xff]
    %v65 = vld [vmem:[#allocation7 + $0x48] sm:$0xff]
    %v66 = vld [vmem:[#allocation7 + $0x50] sm:$0xff]
    %v67 = vld [vmem:[#allocation7 + $0x58] sm:$0xff]
    %v68 = vld [vmem:[#allocation7 + $0x60] sm:$0xff]
    %v69 = vld [vmem:[#allocation7 + $0x68] sm:$0xff]
    %v70 = vld [vmem:[#allocation7 + $0x70] sm:$0xff]
    %v71 = vld [vmem:[#allocation7 + $0x78] sm:$0xff]
    %v72 = vld [vmem:[#allocation7 + $0x80] sm:$0xff]
    %v73 = vld [vmem:[#allocation7 + $0x88] sm:$0xff]
    %v74 = vld [vmem:[#allocation7 + $0x90] sm:$0xff]
    %v75 = vld [vmem:[#allocation7 + $0x98] sm:$0xff]
    %v76 = vld [vmem:[#allocation7 + $0xa0] sm:$0xff]
    %v77 = vld [vmem:[#allocation7 + $0xa8] sm:$0xff]
    %v78 = vld [vmem:[#allocation7 + $0xb0] sm:$0xff]
    %v79 = vld [vmem:[#allocation7 + $0xb8] sm:$0xff]
    %v80 = vld [vmem:[#allocation7 + $0xc0] sm:$0xff]
    %v81 = vld [vmem:[#allocation7 + $0xc8] sm:$0xff]
    %v82 = vld [vmem:[#allocation7 + $0xd0] sm:$0xff]
    %v83 = vld [vmem:[#allocation7 + $0xd8] sm:$0xff]
    %v84 = vld [vmem:[#allocation7 + $0xe0] sm:$0xff]
    %v85 = vld [vmem:[#allocation7 + $0xe8] sm:$0xff]
    %v86 = vld [vmem:[#allocation7 + $0xf0] sm:$0xff]
    %v87 = vld [vmem:[#allocation7 + $0xf8] sm:$0xff]
    %v120 = vunpack.c.l.b16 %v56
    %v121 = vunpack.c.h.b16 %v56
    %v122 = vunpack.c.l.b16 %v57
    %v123 = vunpack.c.h.b16 %v57
    %v124 = vunpack.c.l.b16 %v58
    %v125 = vunpack.c.h.b16 %v58
    %v126 = vunpack.c.l.b16 %v59
    %v127 = vunpack.c.h.b16 %v59
    %v128 = vunpack.c.l.b16 %v60
    %v129 = vunpack.c.h.b16 %v60
    %v130 = vunpack.c.l.b16 %v61
    %v131 = vunpack.c.h.b16 %v61
    %v132 = vunpack.c.l.b16 %v62
    %v133 = vunpack.c.h.b16 %v62
    %v134 = vunpack.c.l.b16 %v63
    %v135 = vunpack.c.h.b16 %v63
    %v136 = vunpack.c.l.b16 %v64
    %v137 = vunpack.c.h.b16 %v64
    %v138 = vunpack.c.l.b16 %v65
    %v139 = vunpack.c.h.b16 %v65
    %v140 = vunpack.c.l.b16 %v66
    %v141 = vunpack.c.h.b16 %v66
    %v142 = vunpack.c.l.b16 %v67
    %v143 = vunpack.c.h.b16 %v67
    %v144 = vunpack.c.l.b16 %v68
    %v145 = vunpack.c.h.b16 %v68
    %v146 = vunpack.c.l.b16 %v69
    %v147 = vunpack.c.h.b16 %v69
    %v148 = vunpack.c.l.b16 %v70
    %v149 = vunpack.c.h.b16 %v70
    %v150 = vunpack.c.l.b16 %v71
    %v151 = vunpack.c.h.b16 %v71
    %v152 = vunpack.c.l.b16 %v72
    %v153 = vunpack.c.h.b16 %v72
    %v154 = vunpack.c.l.b16 %v73
    %v155 = vunpack.c.h.b16 %v73
    %v156 = vunpack.c.l.b16 %v74
    %v157 = vunpack.c.h.b16 %v74
    %v158 = vunpack.c.l.b16 %v75
    %v159 = vunpack.c.h.b16 %v75
    %v160 = vunpack.c.l.b16 %v76
    %v161 = vunpack.c.h.b16 %v76
    %v162 = vunpack.c.l.b16 %v77
    %v163 = vunpack.c.h.b16 %v77
    %v164 = vunpack.c.l.b16 %v78
    %v165 = vunpack.c.h.b16 %v78
    %v166 = vunpack.c.l.b16 %v79
    %v167 = vunpack.c.h.b16 %v79
    %v168 = vunpack.c.l.b16 %v80
    %v169 = vunpack.c.h.b16 %v80
    %v170 = vunpack.c.l.b16 %v81
    %v171 = vunpack.c.h.b16 %v81
    %v172 = vunpack.c.l.b16 %v82
    %v173 = vunpack.c.h.b16 %v82
    %v174 = vunpack.c.l.b16 %v83
    %v175 = vunpack.c.h.b16 %v83
    %v176 = vunpack.c.l.b16 %v84
    %v177 = vunpack.c.h.b16 %v84
    %v178 = vunpack.c.l.b16 %v85
    %v179 = vunpack.c.h.b16 %v85
    %v180 = vunpack.c.l.b16 %v86
    %v181 = vunpack.c.h.b16 %v86
    %v182 = vunpack.c.l.b16 %v87
    %v183 = vunpack.c.h.b16 %v87
    %v184 = vpack.c.b16 %v124, %v120
    %v185 = vpack.c.b16 %v125, %v121
    %v186 = vpack.c.b16 %v126, %v122
    %v187 = vpack.c.b16 %v127, %v123
    %v188 = vpack.c.b16 %v132, %v128
    %v189 = vpack.c.b16 %v133, %v129
    %v190 = vpack.c.b16 %v134, %v130
    %v191 = vpack.c.b16 %v135, %v131
    %v192 = vpack.c.b16 %v140, %v136
    %v193 = vpack.c.b16 %v141, %v137
    %v194 = vpack.c.b16 %v142, %v138
    %v195 = vpack.c.b16 %v143, %v139
    %v196 = vpack.c.b16 %v148, %v144
    %v197 = vpack.c.b16 %v149, %v145
    %v198 = vpack.c.b16 %v150, %v146
    %v199 = vpack.c.b16 %v151, %v147
    %v200 = vpack.c.b16 %v156, %v152
    %v201 = vpack.c.b16 %v157, %v153
    %v202 = vpack.c.b16 %v158, %v154
    %v203 = vpack.c.b16 %v159, %v155
    %v204 = vpack.c.b16 %v164, %v160
    %v205 = vpack.c.b16 %v165, %v161
    %v206 = vpack.c.b16 %v166, %v162
    %v207 = vpack.c.b16 %v167, %v163
    %v208 = vpack.c.b16 %v172, %v168
    %v209 = vpack.c.b16 %v173, %v169
    %v210 = vpack.c.b16 %v174, %v170
    %v211 = vpack.c.b16 %v175, %v171
    %v212 = vpack.c.b16 %v180, %v176
    %v213 = vpack.c.b16 %v181, %v177
    %v214 = vpack.c.b16 %v182, %v178
    %v215 = vpack.c.b16 %v183, %v179
    %248 = vmatprep.subr.bf16.mxu0 %v213
    %249 = vmatpush1.bf16.msra.mxu0 %v212
    %250 = vmatprep.subr.bf16.mxu0 %v209
    %251 = vmatpush1.bf16.msra.mxu0 %v208
    %252 = vmatprep.subr.bf16.mxu0 %v205
    %253 = vmatpush1.bf16.msra.mxu0 %v204
    %254 = vmatprep.subr.bf16.mxu0 %v201
    %255 = vmatpush1.bf16.msra.mxu0 %v200
    %256 = vmatprep.subr.bf16.mxu0 %v197
    %257 = vmatpush1.bf16.msra.mxu0 %v196
    %258 = vmatprep.subr.bf16.mxu0 %v193
    %259 = vmatpush1.bf16.msra.mxu0 %v192
    %260 = vmatprep.subr.bf16.mxu0 %v189
    %261 = vmatpush1.bf16.msra.mxu0 %v188
    %262 = vmatprep.subr.bf16.mxu0 %v185
    %263 = vmatpush1.bf16.msra.mxu0 %v184
    %264 = vmatprep.subr.bf16.mxu0 0
    %265 = vmatpush2.bf16.msra.mxu0 0
    %266 = vmatprep.subr.bf16.mxu0 0
    %267 = vmatpush2.bf16.msra.mxu0 0
    %268 = vmatprep.subr.bf16.mxu0 0
    %269 = vmatpush2.bf16.msra.mxu0 0
    %270 = vmatprep.subr.bf16.mxu0 0
    %271 = vmatpush2.bf16.msra.mxu0 0
    %272 = vmatprep.subr.bf16.mxu0 0
    %273 = vmatpush2.bf16.msra.mxu0 0
    %274 = vmatprep.subr.bf16.mxu0 0
    %275 = vmatpush2.bf16.msra.mxu0 0
    %276 = vmatprep.subr.bf16.mxu0 0
    %277 = vmatpush2.bf16.msra.mxu0 0
    %278 = vmatprep.subr.bf16.mxu0 0
    %279 = vmatpush2.bf16.msra.mxu0 0
    %280 = vmatprep.mubr.bf16.mxu0 0
    %281 = vmatmul.mubr.bf16.gmra.mxu0 %v55
    %v282 = vpop.f32.mrf.mxu0
    %v283 = vadd.f32 0.0, %v282
    %v284 = vpop.f32.mrf.mxu0
    %v285 = vadd.f32 0.0, %v284
    %v286 = vpop.f32.mrf.mxu0
    %v287 = vpop.f32.mrf.mxu0
    %288 = vdwg.mxu0
    %289 = vmatprep.subr.bf16.mxu0 %v215
    %290 = vmatpush1.bf16.msra.mxu0 %v214
    %291 = vmatprep.subr.bf16.mxu0 %v211
    %292 = vmatpush1.bf16.msra.mxu0 %v210
    %293 = vmatprep.subr.bf16.mxu0 %v207
    %294 = vmatpush1.bf16.msra.mxu0 %v206
    %295 = vmatprep.subr.bf16.mxu0 %v203
    %296 = vmatpush1.bf16.msra.mxu0 %v202
    %297 = vmatprep.subr.bf16.mxu0 %v199
    %298 = vmatpush1.bf16.msra.mxu0 %v198
    %299 = vmatprep.subr.bf16.mxu0 %v195
    %300 = vmatpush1.bf16.msra.mxu0 %v194
    %301 = vmatprep.subr.bf16.mxu0 %v191
    %302 = vmatpush1.bf16.msra.mxu0 %v190
    %303 = vmatprep.subr.bf16.mxu0 %v187
    %304 = vmatpush1.bf16.msra.mxu0 %v186
    %305 = vmatprep.subr.bf16.mxu0 0
    %306 = vmatpush2.bf16.msra.mxu0 0
    %307 = vmatprep.subr.bf16.mxu0 0
    %308 = vmatpush2.bf16.msra.mxu0 0
    %309 = vmatprep.subr.bf16.mxu0 0
    %310 = vmatpush2.bf16.msra.mxu0 0
    %311 = vmatprep.subr.bf16.mxu0 0
    %312 = vmatpush2.bf16.msra.mxu0 0
    %313 = vmatprep.subr.bf16.mxu0 0
    %314 = vmatpush2.bf16.msra.mxu0 0
    %315 = vmatprep.subr.bf16.mxu0 0
    %316 = vmatpush2.bf16.msra.mxu0 0
    %317 = vmatprep.subr.bf16.mxu0 0
    %318 = vmatpush2.bf16.msra.mxu0 0
    %319 = vmatprep.subr.bf16.mxu0 0
    %320 = vmatpush2.bf16.msra.mxu0 0
    %321 = vmatprep.mubr.bf16.mxu0 0
    %322 = vmatmul.mubr.bf16.gmra.mxu0 %v55
    %v323 = vpop.f32.mrf.mxu0
    %v324 = vadd.f32 0.0, %v323
    %v325 = vpop.f32.mrf.mxu0
    %v326 = vadd.f32 0.0, %v325
    %v327 = vpop.f32.mrf.mxu0
    %v328 = vpop.f32.mrf.mxu0
    %329 = vdwg.mxu0
    %v330 = vadd.f32 %v51, %v283
    %v331 = vadd.f32 %v52, %v285
    %v332 = vadd.f32 %v53, %v324
    %v333 = vadd.f32 %v54, %v326
    %v334 = vmul.f32 %v330, 0.5
    %v335 = vtanh.pop %v334
    %v336 = vmul.f32 %v335, 0.5
    %v337 = vadd.f32 %v336, 0.5
    %v338 = vmul.f32 %v331, 0.5
    %v339 = vtanh.pop %v338
    %v340 = vmul.f32 %v339, 0.5
    %v341 = vadd.f32 %v340, 0.5
    %v342 = vtanh.pop %v332
    %v343 = vmul.f32 %v333, 0.5
    %v344 = vtanh.pop %v343
    %v345 = vmul.f32 %v344, 0.5
    %v346 = vadd.f32 %v345, 0.5
    %v347 = vmul.f32 %v341, %v48
    %v348 = vmul.f32 %v337, %v342
    %v349 = vadd.f32 %v347, %v348
    %v350 = vtanh.pop %v349
    %v351 = vmul.f32 %v346, %v350
    %s352 = scalar_lea.vmem [#allocation4], 16
    %v353 = vld [vmem:[%s352] sm:$0xff]
    %v354 = vld [vmem:[%s352 + $0x8] sm:$0xff]
    %v355 = vunpack.c.l.bf16 %v353
    %v356 = vunpack.c.h.bf16 %v353
    %v357 = vunpack.c.l.bf16 %v354
    %v358 = vunpack.c.h.bf16 %v354
    %v359 = vpack.c.bf16 %v351, %v351
    %360 = vmatprep.subr.bf16.mxu0 %v213
    %361 = vmatpush1.bf16.msra.mxu0 %v212
    %362 = vmatprep.subr.bf16.mxu0 %v209
    %363 = vmatpush1.bf16.msra.mxu0 %v208
    %364 = vmatprep.subr.bf16.mxu0 %v205
    %365 = vmatpush1.bf16.msra.mxu0 %v204
    %366 = vmatprep.subr.bf16.mxu0 %v201
    %367 = vmatpush1.bf16.msra.mxu0 %v200
    %368 = vmatprep.subr.bf16.mxu0 %v197
    %369 = vmatpush1.bf16.msra.mxu0 %v196
    %370 = vmatprep.subr.bf16.mxu0 %v193
    %371 = vmatpush1.bf16.msra.mxu0 %v192
    %372 = vmatprep.subr.bf16.mxu0 %v189
    %373 = vmatpush1.bf16.msra.mxu0 %v188
    %374 = vmatprep.subr.bf16.mxu0 %v185
    %375 = vmatpush1.bf16.msra.mxu0 %v184
    %376 = vmatprep.subr.bf16.mxu0 0
    %377 = vmatpush2.bf16.msra.mxu0 0
    %378 = vmatprep.subr.bf16.mxu0 0
    %379 = vmatpush2.bf16.msra.mxu0 0
    %380 = vmatprep.subr.bf16.mxu0 0
    %381 = vmatpush2.bf16.msra.mxu0 0
    %382 = vmatprep.subr.bf16.mxu0 0
    %383 = vmatpush2.bf16.msra.mxu0 0
    %384 = vmatprep.subr.bf16.mxu0 0
    %385 = vmatpush2.bf16.msra.mxu0 0
    %386 = vmatprep.subr.bf16.mxu0 0
    %387 = vmatpush2.bf16.msra.mxu0 0
    %388 = vmatprep.subr.bf16.mxu0 0
    %389 = vmatpush2.bf16.msra.mxu0 0
    %390 = vmatprep.subr.bf16.mxu0 0
    %391 = vmatpush2.bf16.msra.mxu0 0
    %392 = vmatprep.mubr.bf16.mxu0 0
    %393 = vmatmul.mubr.bf16.gmra.mxu0 %v359
    %v394 = vpop.f32.mrf.mxu0
    %v395 = vadd.f32 0.0, %v394
    %v396 = vpop.f32.mrf.mxu0
    %v397 = vadd.f32 0.0, %v396
    %v398 = vpop.f32.mrf.mxu0
    %v399 = vpop.f32.mrf.mxu0
    %400 = vdwg.mxu0
    %401 = vmatprep.subr.bf16.mxu0 %v215
    %402 = vmatpush1.bf16.msra.mxu0 %v214
    %403 = vmatprep.subr.bf16.mxu0 %v211
    %404 = vmatpush1.bf16.msra.mxu0 %v210
    %405 = vmatprep.subr.bf16.mxu0 %v207
    %406 = vmatpush1.bf16.msra.mxu0 %v206
    %407 = vmatprep.subr.bf16.mxu0 %v203
    %408 = vmatpush1.bf16.msra.mxu0 %v202
    %409 = vmatprep.subr.bf16.mxu0 %v199
    %410 = vmatpush1.bf16.msra.mxu0 %v198
    %411 = vmatprep.subr.bf16.mxu0 %v195
    %412 = vmatpush1.bf16.msra.mxu0 %v194
    %413 = vmatprep.subr.bf16.mxu0 %v191
    %414 = vmatpush1.bf16.msra.mxu0 %v190
    %415 = vmatprep.subr.bf16.mxu0 %v187
    %416 = vmatpush1.bf16.msra.mxu0 %v186
    %417 = vmatprep.subr.bf16.mxu0 0
    %418 = vmatpush2.bf16.msra.mxu0 0
    %419 = vmatprep.subr.bf16.mxu0 0
    %420 = vmatpush2.bf16.msra.mxu0 0
    %421 = vmatprep.subr.bf16.mxu0 0
    %422 = vmatpush2.bf16.msra.mxu0 0
    %423 = vmatprep.subr.bf16.mxu0 0
    %424 = vmatpush2.bf16.msra.mxu0 0
    %425 = vmatprep.subr.bf16.mxu0 0
    %426 = vmatpush2.bf16.msra.mxu0 0
    %427 = vmatprep.subr.bf16.mxu0 0
    %428 = vmatpush2.bf16.msra.mxu0 0
    %429 = vmatprep.subr.bf16.mxu0 0
    %430 = vmatpush2.bf16.msra.mxu0 0
    %431 = vmatprep.subr.bf16.mxu0 0
    %432 = vmatpush2.bf16.msra.mxu0 0
    %433 = vmatprep.mubr.bf16.mxu0 0
    %434 = vmatmul.mubr.bf16.gmra.mxu0 %v359
    %v435 = vpop.f32.mrf.mxu0
    %v436 = vadd.f32 0.0, %v435
    %v437 = vpop.f32.mrf.mxu0
    %v438 = vadd.f32 0.0, %v437
    %v439 = vpop.f32.mrf.mxu0
    %v440 = vpop.f32.mrf.mxu0
    %441 = vdwg.mxu0
    %v442 = vadd.f32 %v355, %v395
    %v443 = vadd.f32 %v356, %v397
    %v444 = vadd.f32 %v357, %v436
    %v445 = vadd.f32 %v358, %v438
    %v446 = vmul.f32 %v442, 0.5
    %v447 = vtanh.pop %v446
    %v448 = vmul.f32 %v447, 0.5
    %v449 = vadd.f32 %v448, 0.5
    %v450 = vmul.f32 %v443, 0.5
    %v451 = vtanh.pop %v450
    %v452 = vmul.f32 %v451, 0.5
    %v453 = vadd.f32 %v452, 0.5
    %v454 = vtanh.pop %v444
    %v455 = vmul.f32 %v445, 0.5
    %v456 = vtanh.pop %v455
    %v457 = vmul.f32 %v456, 0.5
    %v458 = vadd.f32 %v457, 0.5
    %v459 = vmul.f32 %v453, %v349
    %v460 = vmul.f32 %v449, %v454
    %v461 = vadd.f32 %v459, %v460
    %v462 = vtanh.pop %v461
    %v463 = vmul.f32 %v458, %v462
    %s464 = scalar_lea.vmem [#allocation4], 32
    %v465 = vld [vmem:[%s464] sm:$0xff]
    %v466 = vld [vmem:[%s464 + $0x8] sm:$0xff]
    %v467 = vunpack.c.l.bf16 %v465
    %v468 = vunpack.c.h.bf16 %v465
    %v469 = vunpack.c.l.bf16 %v466
    %v470 = vunpack.c.h.bf16 %v466
    %v471 = vpack.c.bf16 %v463, %v463
    %472 = vmatprep.subr.bf16.mxu0 %v213
    %473 = vmatpush1.bf16.msra.mxu0 %v212
    %474 = vmatprep.subr.bf16.mxu0 %v209
    %475 = vmatpush1.bf16.msra.mxu0 %v208
    %476 = vmatprep.subr.bf16.mxu0 %v205
    %477 = vmatpush1.bf16.msra.mxu0 %v204
    %478 = vmatprep.subr.bf16.mxu0 %v201
    %479 = vmatpush1.bf16.msra.mxu0 %v200
    %480 = vmatprep.subr.bf16.mxu0 %v197
    %481 = vmatpush1.bf16.msra.mxu0 %v196
    %482 = vmatprep.subr.bf16.mxu0 %v193
    %483 = vmatpush1.bf16.msra.mxu0 %v192
    %484 = vmatprep.subr.bf16.mxu0 %v189
    %485 = vmatpush1.bf16.msra.mxu0 %v188
    %486 = vmatprep.subr.bf16.mxu0 %v185
    %487 = vmatpush1.bf16.msra.mxu0 %v184
    %488 = vmatprep.subr.bf16.mxu0 0
    %489 = vmatpush2.bf16.msra.mxu0 0
    %490 = vmatprep.subr.bf16.mxu0 0
    %491 = vmatpush2.bf16.msra.mxu0 0
    %492 = vmatprep.subr.bf16.mxu0 0
    %493 = vmatpush2.bf16.msra.mxu0 0
    %494 = vmatprep.subr.bf16.mxu0 0
    %495 = vmatpush2.bf16.msra.mxu0 0
    %496 = vmatprep.subr.bf16.mxu0 0
    %497 = vmatpush2.bf16.msra.mxu0 0
    %498 = vmatprep.subr.bf16.mxu0 0
    %499 = vmatpush2.bf16.msra.mxu0 0
    %500 = vmatprep.subr.bf16.mxu0 0
    %501 = vmatpush2.bf16.msra.mxu0 0
    %502 = vmatprep.subr.bf16.mxu0 0
    %503 = vmatpush2.bf16.msra.mxu0 0
    %504 = vmatprep.mubr.bf16.mxu0 0
    %505 = vmatmul.mubr.bf16.gmra.mxu0 %v471
    %v506 = vpop.f32.mrf.mxu0
    %v507 = vadd.f32 0.0, %v506
    %v508 = vpop.f32.mrf.mxu0
    %v509 = vadd.f32 0.0, %v508
    %v510 = vpop.f32.mrf.mxu0
    %v511 = vpop.f32.mrf.mxu0
    %512 = vdwg.mxu0
    %513 = vmatprep.subr.bf16.mxu0 %v215
    %514 = vmatpush1.bf16.msra.mxu0 %v214
    %515 = vmatprep.subr.bf16.mxu0 %v211
    %516 = vmatpush1.bf16.msra.mxu0 %v210
    %517 = vmatprep.subr.bf16.mxu0 %v207
    %518 = vmatpush1.bf16.msra.mxu0 %v206
    %519 = vmatprep.subr.bf16.mxu0 %v203
    %520 = vmatpush1.bf16.msra.mxu0 %v202
    %521 = vmatprep.subr.bf16.mxu0 %v199
    %522 = vmatpush1.bf16.msra.mxu0 %v198
    %523 = vmatprep.subr.bf16.mxu0 %v195
    %524 = vmatpush1.bf16.msra.mxu0 %v194
    %525 = vmatprep.subr.bf16.mxu0 %v191
    %526 = vmatpush1.bf16.msra.mxu0 %v190
    %527 = vmatprep.subr.bf16.mxu0 %v187
    %528 = vmatpush1.bf16.msra.mxu0 %v186
    %529 = vmatprep.subr.bf16.mxu0 0
    %530 = vmatpush2.bf16.msra.mxu0 0
    %531 = vmatprep.subr.bf16.mxu0 0
    %532 = vmatpush2.bf16.msra.mxu0 0
    %533 = vmatprep.subr.bf16.mxu0 0
    %534 = vmatpush2.bf16.msra.mxu0 0
    %535 = vmatprep.subr.bf16.mxu0 0
    %536 = vmatpush2.bf16.msra.mxu0 0
    %537 = vmatprep.subr.bf16.mxu0 0
    %538 = vmatpush2.bf16.msra.mxu0 0
    %539 = vmatprep.subr.bf16.mxu0 0
    %540 = vmatpush2.bf16.msra.mxu0 0
    %541 = vmatprep.subr.bf16.mxu0 0
    %542 = vmatpush2.bf16.msra.mxu0 0
    %543 = vmatprep.subr.bf16.mxu0 0
    %544 = vmatpush2.bf16.msra.mxu0 0
    %545 = vmatprep.mubr.bf16.mxu0 0
    %546 = vmatmul.mubr.bf16.gmra.mxu0 %v471
    %v547 = vpop.f32.mrf.mxu0
    %v548 = vadd.f32 0.0, %v547
    %v549 = vpop.f32.mrf.mxu0
    %v550 = vadd.f32 0.0, %v549
    %v551 = vpop.f32.mrf.mxu0
    %v552 = vpop.f32.mrf.mxu0
    %553 = vdwg.mxu0
    %v554 = vadd.f32 %v467, %v507
    %v555 = vadd.f32 %v468, %v509
    %v556 = vadd.f32 %v469, %v548
    %v557 = vadd.f32 %v470, %v550
    %v558 = vmul.f32 %v554, 0.5
    %v559 = vtanh.pop %v558
    %v560 = vmul.f32 %v559, 0.5
    %v561 = vadd.f32 %v560, 0.5
    %v562 = vmul.f32 %v555, 0.5
    %v563 = vtanh.pop %v562
    %v564 = vmul.f32 %v563, 0.5
    %v565 = vadd.f32 %v564, 0.5
    %v566 = vtanh.pop %v556
    %v567 = vmul.f32 %v557, 0.5
    %v568 = vtanh.pop %v567
    %v569 = vmul.f32 %v568, 0.5
    %v570 = vadd.f32 %v569, 0.5
    %v571 = vmul.f32 %v565, %v461
    %v572 = vmul.f32 %v561, %v566
    %v573 = vadd.f32 %v571, %v572
    %v574 = vtanh.pop %v573
    %v575 = vmul.f32 %v570, %v574
    %s576 = scalar_lea.vmem [#allocation4], 48
    %v577 = vld [vmem:[%s576] sm:$0xff]
    %v578 = vld [vmem:[%s576 + $0x8] sm:$0xff]
    %v579 = vunpack.c.l.bf16 %v577
    %v580 = vunpack.c.h.bf16 %v577
    %v581 = vunpack.c.l.bf16 %v578
    %v582 = vunpack.c.h.bf16 %v578
    %v583 = vpack.c.bf16 %v575, %v575
    %584 = vmatprep.subr.bf16.mxu0 %v213
    %585 = vmatpush1.bf16.msra.mxu0 %v212
    %586 = vmatprep.subr.bf16.mxu0 %v209
    %587 = vmatpush1.bf16.msra.mxu0 %v208
    %588 = vmatprep.subr.bf16.mxu0 %v205
    %589 = vmatpush1.bf16.msra.mxu0 %v204
    %590 = vmatprep.subr.bf16.mxu0 %v201
    %591 = vmatpush1.bf16.msra.mxu0 %v200
    %592 = vmatprep.subr.bf16.mxu0 %v197
    %593 = vmatpush1.bf16.msra.mxu0 %v196
    %594 = vmatprep.subr.bf16.mxu0 %v193
    %595 = vmatpush1.bf16.msra.mxu0 %v192
    %596 = vmatprep.subr.bf16.mxu0 %v189
    %597 = vmatpush1.bf16.msra.mxu0 %v188
    %598 = vmatprep.subr.bf16.mxu0 %v185
    %599 = vmatpush1.bf16.msra.mxu0 %v184
    %600 = vmatprep.subr.bf16.mxu0 0
    %601 = vmatpush2.bf16.msra.mxu0 0
    %602 = vmatprep.subr.bf16.mxu0 0
    %603 = vmatpush2.bf16.msra.mxu0 0
    %604 = vmatprep.subr.bf16.mxu0 0
    %605 = vmatpush2.bf16.msra.mxu0 0
    %606 = vmatprep.subr.bf16.mxu0 0
    %607 = vmatpush2.bf16.msra.mxu0 0
    %608 = vmatprep.subr.bf16.mxu0 0
    %609 = vmatpush2.bf16.msra.mxu0 0
    %610 = vmatprep.subr.bf16.mxu0 0
    %611 = vmatpush2.bf16.msra.mxu0 0
    %612 = vmatprep.subr.bf16.mxu0 0
    %613 = vmatpush2.bf16.msra.mxu0 0
    %614 = vmatprep.subr.bf16.mxu0 0
    %615 = vmatpush2.bf16.msra.mxu0 0
    %616 = vmatprep.mubr.bf16.mxu0 0
    %617 = vmatmul.mubr.bf16.gmra.mxu0 %v583
    %v618 = vpop.f32.mrf.mxu0
    %v619 = vadd.f32 0.0, %v618
    %v620 = vpop.f32.mrf.mxu0
    %v621 = vadd.f32 0.0, %v620
    %v622 = vpop.f32.mrf.mxu0
    %v623 = vpop.f32.mrf.mxu0
    %624 = vdwg.mxu0
    %625 = vmatprep.subr.bf16.mxu0 %v215
    %626 = vmatpush1.bf16.msra.mxu0 %v214
    %627 = vmatprep.subr.bf16.mxu0 %v211
    %628 = vmatpush1.bf16.msra.mxu0 %v210
    %629 = vmatprep.subr.bf16.mxu0 %v207
    %630 = vmatpush1.bf16.msra.mxu0 %v206
    %631 = vmatprep.subr.bf16.mxu0 %v203
    %632 = vmatpush1.bf16.msra.mxu0 %v202
    %633 = vmatprep.subr.bf16.mxu0 %v199
    %634 = vmatpush1.bf16.msra.mxu0 %v198
    %635 = vmatprep.subr.bf16.mxu0 %v195
    %636 = vmatpush1.bf16.msra.mxu0 %v194
    %637 = vmatprep.subr.bf16.mxu0 %v191
    %638 = vmatpush1.bf16.msra.mxu0 %v190
    %639 = vmatprep.subr.bf16.mxu0 %v187
    %640 = vmatpush1.bf16.msra.mxu0 %v186
    %641 = vmatprep.subr.bf16.mxu0 0
    %642 = vmatpush2.bf16.msra.mxu0 0
    %643 = vmatprep.subr.bf16.mxu0 0
    %644 = vmatpush2.bf16.msra.mxu0 0
    %645 = vmatprep.subr.bf16.mxu0 0
    %646 = vmatpush2.bf16.msra.mxu0 0
    %647 = vmatprep.subr.bf16.mxu0 0
    %648 = vmatpush2.bf16.msra.mxu0 0
    %649 = vmatprep.subr.bf16.mxu0 0
    %650 = vmatpush2.bf16.msra.mxu0 0
    %651 = vmatprep.subr.bf16.mxu0 0
    %652 = vmatpush2.bf16.msra.mxu0 0
    %653 = vmatprep.subr.bf16.mxu0 0
    %654 = vmatpush2.bf16.msra.mxu0 0
    %655 = vmatprep.subr.bf16.mxu0 0
    %656 = vmatpush2.bf16.msra.mxu0 0
    %657 = vmatprep.mubr.bf16.mxu0 0
    %658 = vmatmul.mubr.bf16.gmra.mxu0 %v583
    %v659 = vpop.f32.mrf.mxu0
    %v660 = vadd.f32 0.0, %v659
    %v661 = vpop.f32.mrf.mxu0
    %v662 = vadd.f32 0.0, %v661
    %v663 = vpop.f32.mrf.mxu0
    %v664 = vpop.f32.mrf.mxu0
    %665 = vdwg.mxu0
    %v666 = vadd.f32 %v579, %v619
    %v667 = vadd.f32 %v580, %v621
    %v668 = vadd.f32 %v581, %v660
    %v669 = vadd.f32 %v582, %v662
    %v670 = vmul.f32 %v666, 0.5
    %v671 = vtanh.pop %v670
    %v672 = vmul.f32 %v671, 0.5
    %v673 = vadd.f32 %v672, 0.5
    %v674 = vmul.f32 %v667, 0.5
    %v675 = vtanh.pop %v674
    %v676 = vmul.f32 %v675, 0.5
    %v677 = vadd.f32 %v676, 0.5
    %v678 = vtanh.pop %v668
    %v679 = vmul.f32 %v669, 0.5
    %v680 = vtanh.pop %v679
    %v681 = vmul.f32 %v680, 0.5
    %v682 = vadd.f32 %v681, 0.5
    %v683 = vmul.f32 %v677, %v573
    %v684 = vmul.f32 %v673, %v678
    %v685 = vadd.f32 %v683, %v684
    %v686 = vtanh.pop %v685
    %v687 = vmul.f32 %v682, %v686
    %s688 = scalar_lea.vmem [#allocation4], 64
    %v689 = vld [vmem:[%s688] sm:$0xff]
    %v690 = vld [vmem:[%s688 + $0x8] sm:$0xff]
    %v691 = vunpack.c.l.bf16 %v689
    %v692 = vunpack.c.h.bf16 %v689
    %v693 = vunpack.c.l.bf16 %v690
    %v694 = vunpack.c.h.bf16 %v690
    %v695 = vpack.c.bf16 %v687, %v687
    %696 = vmatprep.subr.bf16.mxu0 %v213
    %697 = vmatpush1.bf16.msra.mxu0 %v212
    %698 = vmatprep.subr.bf16.mxu0 %v209
    %699 = vmatpush1.bf16.msra.mxu0 %v208
    %700 = vmatprep.subr.bf16.mxu0 %v205
    %701 = vmatpush1.bf16.msra.mxu0 %v204
    %702 = vmatprep.subr.bf16.mxu0 %v201
    %703 = vmatpush1.bf16.msra.mxu0 %v200
    %704 = vmatprep.subr.bf16.mxu0 %v197
    %705 = vmatpush1.bf16.msra.mxu0 %v196
    %706 = vmatprep.subr.bf16.mxu0 %v193
    %707 = vmatpush1.bf16.msra.mxu0 %v192
    %708 = vmatprep.subr.bf16.mxu0 %v189
    %709 = vmatpush1.bf16.msra.mxu0 %v188
    %710 = vmatprep.subr.bf16.mxu0 %v185
    %711 = vmatpush1.bf16.msra.mxu0 %v184
    %712 = vmatprep.subr.bf16.mxu0 0
    %713 = vmatpush2.bf16.msra.mxu0 0
    %714 = vmatprep.subr.bf16.mxu0 0
    %715 = vmatpush2.bf16.msra.mxu0 0
    %716 = vmatprep.subr.bf16.mxu0 0
    %717 = vmatpush2.bf16.msra.mxu0 0
    %718 = vmatprep.subr.bf16.mxu0 0
    %719 = vmatpush2.bf16.msra.mxu0 0
    %720 = vmatprep.subr.bf16.mxu0 0
    %721 = vmatpush2.bf16.msra.mxu0 0
    %722 = vmatprep.subr.bf16.mxu0 0
    %723 = vmatpush2.bf16.msra.mxu0 0
    %724 = vmatprep.subr.bf16.mxu0 0
    %725 = vmatpush2.bf16.msra.mxu0 0
    %726 = vmatprep.subr.bf16.mxu0 0
    %727 = vmatpush2.bf16.msra.mxu0 0
    %728 = vmatprep.mubr.bf16.mxu0 0
    %729 = vmatmul.mubr.bf16.gmra.mxu0 %v695
    %v730 = vpop.f32.mrf.mxu0
    %v731 = vadd.f32 0.0, %v730
    %v732 = vpop.f32.mrf.mxu0
    %v733 = vadd.f32 0.0, %v732
    %v734 = vpop.f32.mrf.mxu0
    %v735 = vpop.f32.mrf.mxu0
    %736 = vdwg.mxu0
    %737 = vmatprep.subr.bf16.mxu0 %v215
    %738 = vmatpush1.bf16.msra.mxu0 %v214
    %739 = vmatprep.subr.bf16.mxu0 %v211
    %740 = vmatpush1.bf16.msra.mxu0 %v210
    %741 = vmatprep.subr.bf16.mxu0 %v207
    %742 = vmatpush1.bf16.msra.mxu0 %v206
    %743 = vmatprep.subr.bf16.mxu0 %v203
    %744 = vmatpush1.bf16.msra.mxu0 %v202
    %745 = vmatprep.subr.bf16.mxu0 %v199
    %746 = vmatpush1.bf16.msra.mxu0 %v198
    %747 = vmatprep.subr.bf16.mxu0 %v195
    %748 = vmatpush1.bf16.msra.mxu0 %v194
    %749 = vmatprep.subr.bf16.mxu0 %v191
    %750 = vmatpush1.bf16.msra.mxu0 %v190
    %751 = vmatprep.subr.bf16.mxu0 %v187
    %752 = vmatpush1.bf16.msra.mxu0 %v186
    %753 = vmatprep.subr.bf16.mxu0 0
    %754 = vmatpush2.bf16.msra.mxu0 0
    %755 = vmatprep.subr.bf16.mxu0 0
    %756 = vmatpush2.bf16.msra.mxu0 0
    %757 = vmatprep.subr.bf16.mxu0 0
    %758 = vmatpush2.bf16.msra.mxu0 0
    %759 = vmatprep.subr.bf16.mxu0 0
    %760 = vmatpush2.bf16.msra.mxu0 0
    %761 = vmatprep.subr.bf16.mxu0 0
    %762 = vmatpush2.bf16.msra.mxu0 0
    %763 = vmatprep.subr.bf16.mxu0 0
    %764 = vmatpush2.bf16.msra.mxu0 0
    %765 = vmatprep.subr.bf16.mxu0 0
    %766 = vmatpush2.bf16.msra.mxu0 0
    %767 = vmatprep.subr.bf16.mxu0 0
    %768 = vmatpush2.bf16.msra.mxu0 0
    %769 = vmatprep.mubr.bf16.mxu0 0
    %770 = vmatmul.mubr.bf16.gmra.mxu0 %v695
    %v771 = vpop.f32.mrf.mxu0
    %v772 = vadd.f32 0.0, %v771
    %v773 = vpop.f32.mrf.mxu0
    %v774 = vadd.f32 0.0, %v773
    %v775 = vpop.f32.mrf.mxu0
    %v776 = vpop.f32.mrf.mxu0
    %777 = vdwg.mxu0
    %v778 = vadd.f32 %v691, %v731
    %v779 = vadd.f32 %v692, %v733
    %v780 = vadd.f32 %v693, %v772
    %v781 = vadd.f32 %v694, %v774
    %v782 = vmul.f32 %v778, 0.5
    %v783 = vtanh.pop %v782
    %v784 = vmul.f32 %v783, 0.5
    %v785 = vadd.f32 %v784, 0.5
    %v786 = vmul.f32 %v779, 0.5
    %v787 = vtanh.pop %v786
    %v788 = vmul.f32 %v787, 0.5
    %v789 = vadd.f32 %v788, 0.5
    %v790 = vtanh.pop %v780
    %v791 = vmul.f32 %v781, 0.5
    %v792 = vtanh.pop %v791
    %v793 = vmul.f32 %v792, 0.5
    %v794 = vadd.f32 %v793, 0.5
    %v795 = vmul.f32 %v789, %v685
    %v796 = vmul.f32 %v785, %v790
    %v797 = vadd.f32 %v795, %v796
    %v798 = vtanh.pop %v797
    %v799 = vmul.f32 %v794, %v798
    %s800 = scalar_lea.vmem [#allocation4], 80
    %v801 = vld [vmem:[%s800] sm:$0xff]
    %v802 = vld [vmem:[%s800 + $0x8] sm:$0xff]
    %v803 = vunpack.c.l.bf16 %v801
    %v804 = vunpack.c.h.bf16 %v801
    %v805 = vunpack.c.l.bf16 %v802
    %v806 = vunpack.c.h.bf16 %v802
    %v807 = vpack.c.bf16 %v799, %v799
    %808 = vmatprep.subr.bf16.mxu0 %v213
    %809 = vmatpush1.bf16.msra.mxu0 %v212
    %810 = vmatprep.subr.bf16.mxu0 %v209
    %811 = vmatpush1.bf16.msra.mxu0 %v208
    %812 = vmatprep.subr.bf16.mxu0 %v205
    %813 = vmatpush1.bf16.msra.mxu0 %v204
    %814 = vmatprep.subr.bf16.mxu0 %v201
    %815 = vmatpush1.bf16.msra.mxu0 %v200
    %816 = vmatprep.subr.bf16.mxu0 %v197
    %817 = vmatpush1.bf16.msra.mxu0 %v196
    %818 = vmatprep.subr.bf16.mxu0 %v193
    %819 = vmatpush1.bf16.msra.mxu0 %v192
    %820 = vmatprep.subr.bf16.mxu0 %v189
    %821 = vmatpush1.bf16.msra.mxu0 %v188
    %822 = vmatprep.subr.bf16.mxu0 %v185
    %823 = vmatpush1.bf16.msra.mxu0 %v184
    %824 = vmatprep.subr.bf16.mxu0 0
    %825 = vmatpush2.bf16.msra.mxu0 0
    %826 = vmatprep.subr.bf16.mxu0 0
    %827 = vmatpush2.bf16.msra.mxu0 0
    %828 = vmatprep.subr.bf16.mxu0 0
    %829 = vmatpush2.bf16.msra.mxu0 0
    %830 = vmatprep.subr.bf16.mxu0 0
    %831 = vmatpush2.bf16.msra.mxu0 0
    %832 = vmatprep.subr.bf16.mxu0 0
    %833 = vmatpush2.bf16.msra.mxu0 0
    %834 = vmatprep.subr.bf16.mxu0 0
    %835 = vmatpush2.bf16.msra.mxu0 0
    %836 = vmatprep.subr.bf16.mxu0 0
    %837 = vmatpush2.bf16.msra.mxu0 0
    %838 = vmatprep.subr.bf16.mxu0 0
    %839 = vmatpush2.bf16.msra.mxu0 0
    %840 = vmatprep.mubr.bf16.mxu0 0
    %841 = vmatmul.mubr.bf16.gmra.mxu0 %v807
    %v842 = vpop.f32.mrf.mxu0
    %v843 = vadd.f32 0.0, %v842
    %v844 = vpop.f32.mrf.mxu0
    %v845 = vadd.f32 0.0, %v844
    %v846 = vpop.f32.mrf.mxu0
    %v847 = vpop.f32.mrf.mxu0
    %848 = vdwg.mxu0
    %849 = vmatprep.subr.bf16.mxu0 %v215
    %850 = vmatpush1.bf16.msra.mxu0 %v214
    %851 = vmatprep.subr.bf16.mxu0 %v211
    %852 = vmatpush1.bf16.msra.mxu0 %v210
    %853 = vmatprep.subr.bf16.mxu0 %v207
    %854 = vmatpush1.bf16.msra.mxu0 %v206
    %855 = vmatprep.subr.bf16.mxu0 %v203
    %856 = vmatpush1.bf16.msra.mxu0 %v202
    %857 = vmatprep.subr.bf16.mxu0 %v199
    %858 = vmatpush1.bf16.msra.mxu0 %v198
    %859 = vmatprep.subr.bf16.mxu0 %v195
    %860 = vmatpush1.bf16.msra.mxu0 %v194
    %861 = vmatprep.subr.bf16.mxu0 %v191
    %862 = vmatpush1.bf16.msra.mxu0 %v190
    %863 = vmatprep.subr.bf16.mxu0 %v187
    %864 = vmatpush1.bf16.msra.mxu0 %v186
    %865 = vmatprep.subr.bf16.mxu0 0
    %866 = vmatpush2.bf16.msra.mxu0 0
    %867 = vmatprep.subr.bf16.mxu0 0
    %868 = vmatpush2.bf16.msra.mxu0 0
    %869 = vmatprep.subr.bf16.mxu0 0
    %870 = vmatpush2.bf16.msra.mxu0 0
    %871 = vmatprep.subr.bf16.mxu0 0
    %872 = vmatpush2.bf16.msra.mxu0 0
    %873 = vmatprep.subr.bf16.mxu0 0
    %874 = vmatpush2.bf16.msra.mxu0 0
    %875 = vmatprep.subr.bf16.mxu0 0
    %876 = vmatpush2.bf16.msra.mxu0 0
    %877 = vmatprep.subr.bf16.mxu0 0
    %878 = vmatpush2.bf16.msra.mxu0 0
    %879 = vmatprep.subr.bf16.mxu0 0
    %880 = vmatpush2.bf16.msra.mxu0 0
    %881 = vmatprep.mubr.bf16.mxu0 0
    %882 = vmatmul.mubr.bf16.gmra.mxu0 %v807
    %v883 = vpop.f32.mrf.mxu0
    %v884 = vadd.f32 0.0, %v883
    %v885 = vpop.f32.mrf.mxu0
    %v886 = vadd.f32 0.0, %v885
    %v887 = vpop.f32.mrf.mxu0
    %v888 = vpop.f32.mrf.mxu0
    %889 = vdwg.mxu0
    %v890 = vadd.f32 %v803, %v843
    %v891 = vadd.f32 %v804, %v845
    %v892 = vadd.f32 %v805, %v884
    %v893 = vadd.f32 %v806, %v886
    %v894 = vmul.f32 %v890, 0.5
    %v895 = vtanh.pop %v894
    %v896 = vmul.f32 %v895, 0.5
    %v897 = vadd.f32 %v896, 0.5
    %v898 = vmul.f32 %v891, 0.5
    %v899 = vtanh.pop %v898
    %v900 = vmul.f32 %v899, 0.5
    %v901 = vadd.f32 %v900, 0.5
    %v902 = vtanh.pop %v892
    %v903 = vmul.f32 %v893, 0.5
    %v904 = vtanh.pop %v903
    %v905 = vmul.f32 %v904, 0.5
    %v906 = vadd.f32 %v905, 0.5
    %v907 = vmul.f32 %v901, %v797
    %v908 = vmul.f32 %v897, %v902
    %v909 = vadd.f32 %v907, %v908
    %v910 = vtanh.pop %v909
    %v911 = vmul.f32 %v906, %v910
    %s912 = scalar_lea.vmem [#allocation4], 96
    %v913 = vld [vmem:[%s912] sm:$0xff]
    %v914 = vld [vmem:[%s912 + $0x8] sm:$0xff]
    %v915 = vunpack.c.l.bf16 %v913
    %v916 = vunpack.c.h.bf16 %v913
    %v917 = vunpack.c.l.bf16 %v914
    %v918 = vunpack.c.h.bf16 %v914
    %v919 = vpack.c.bf16 %v911, %v911
    %920 = vmatprep.subr.bf16.mxu0 %v213
    %921 = vmatpush1.bf16.msra.mxu0 %v212
    %922 = vmatprep.subr.bf16.mxu0 %v209
    %923 = vmatpush1.bf16.msra.mxu0 %v208
    %924 = vmatprep.subr.bf16.mxu0 %v205
    %925 = vmatpush1.bf16.msra.mxu0 %v204
    %926 = vmatprep.subr.bf16.mxu0 %v201
    %927 = vmatpush1.bf16.msra.mxu0 %v200
    %928 = vmatprep.subr.bf16.mxu0 %v197
    %929 = vmatpush1.bf16.msra.mxu0 %v196
    %930 = vmatprep.subr.bf16.mxu0 %v193
    %931 = vmatpush1.bf16.msra.mxu0 %v192
    %932 = vmatprep.subr.bf16.mxu0 %v189
    %933 = vmatpush1.bf16.msra.mxu0 %v188
    %934 = vmatprep.subr.bf16.mxu0 %v185
    %935 = vmatpush1.bf16.msra.mxu0 %v184
    %936 = vmatprep.subr.bf16.mxu0 0
    %937 = vmatpush2.bf16.msra.mxu0 0
    %938 = vmatprep.subr.bf16.mxu0 0
    %939 = vmatpush2.bf16.msra.mxu0 0
    %940 = vmatprep.subr.bf16.mxu0 0
    %941 = vmatpush2.bf16.msra.mxu0 0
    %942 = vmatprep.subr.bf16.mxu0 0
    %943 = vmatpush2.bf16.msra.mxu0 0
    %944 = vmatprep.subr.bf16.mxu0 0
    %945 = vmatpush2.bf16.msra.mxu0 0
    %946 = vmatprep.subr.bf16.mxu0 0
    %947 = vmatpush2.bf16.msra.mxu0 0
    %948 = vmatprep.subr.bf16.mxu0 0
    %949 = vmatpush2.bf16.msra.mxu0 0
    %950 = vmatprep.subr.bf16.mxu0 0
    %951 = vmatpush2.bf16.msra.mxu0 0
    %952 = vmatprep.mubr.bf16.mxu0 0
    %953 = vmatmul.mubr.bf16.gmra.mxu0 %v919
    %v954 = vpop.f32.mrf.mxu0
    %v955 = vadd.f32 0.0, %v954
    %v956 = vpop.f32.mrf.mxu0
    %v957 = vadd.f32 0.0, %v956
    %v958 = vpop.f32.mrf.mxu0
    %v959 = vpop.f32.mrf.mxu0
    %960 = vdwg.mxu0
    %961 = vmatprep.subr.bf16.mxu0 %v215
    %962 = vmatpush1.bf16.msra.mxu0 %v214
    %963 = vmatprep.subr.bf16.mxu0 %v211
    %964 = vmatpush1.bf16.msra.mxu0 %v210
    %965 = vmatprep.subr.bf16.mxu0 %v207
    %966 = vmatpush1.bf16.msra.mxu0 %v206
    %967 = vmatprep.subr.bf16.mxu0 %v203
    %968 = vmatpush1.bf16.msra.mxu0 %v202
    %969 = vmatprep.subr.bf16.mxu0 %v199
    %970 = vmatpush1.bf16.msra.mxu0 %v198
    %971 = vmatprep.subr.bf16.mxu0 %v195
    %972 = vmatpush1.bf16.msra.mxu0 %v194
    %973 = vmatprep.subr.bf16.mxu0 %v191
    %974 = vmatpush1.bf16.msra.mxu0 %v190
    %975 = vmatprep.subr.bf16.mxu0 %v187
    %976 = vmatpush1.bf16.msra.mxu0 %v186
    %977 = vmatprep.subr.bf16.mxu0 0
    %978 = vmatpush2.bf16.msra.mxu0 0
    %979 = vmatprep.subr.bf16.mxu0 0
    %980 = vmatpush2.bf16.msra.mxu0 0
    %981 = vmatprep.subr.bf16.mxu0 0
    %982 = vmatpush2.bf16.msra.mxu0 0
    %983 = vmatprep.subr.bf16.mxu0 0
    %984 = vmatpush2.bf16.msra.mxu0 0
    %985 = vmatprep.subr.bf16.mxu0 0
    %986 = vmatpush2.bf16.msra.mxu0 0
    %987 = vmatprep.subr.bf16.mxu0 0
    %988 = vmatpush2.bf16.msra.mxu0 0
    %989 = vmatprep.subr.bf16.mxu0 0
    %990 = vmatpush2.bf16.msra.mxu0 0
    %991 = vmatprep.subr.bf16.mxu0 0
    %992 = vmatpush2.bf16.msra.mxu0 0
    %993 = vmatprep.mubr.bf16.mxu0 0
    %994 = vmatmul.mubr.bf16.gmra.mxu0 %v919
    %v995 = vpop.f32.mrf.mxu0
    %v996 = vadd.f32 0.0, %v995
    %v997 = vpop.f32.mrf.mxu0
    %v998 = vadd.f32 0.0, %v997
    %v999 = vpop.f32.mrf.mxu0
    %v1000 = vpop.f32.mrf.mxu0
    %1001 = vdwg.mxu0
    %v1002 = vadd.f32 %v915, %v955
    %v1003 = vadd.f32 %v916, %v957
    %v1004 = vadd.f32 %v917, %v996
    %v1005 = vadd.f32 %v918, %v998
    %v1006 = vmul.f32 %v1002, 0.5
    %v1007 = vtanh.pop %v1006
    %v1008 = vmul.f32 %v1007, 0.5
    %v1009 = vadd.f32 %v1008, 0.5
    %v1010 = vmul.f32 %v1003, 0.5
    %v1011 = vtanh.pop %v1010
    %v1012 = vmul.f32 %v1011, 0.5
    %v1013 = vadd.f32 %v1012, 0.5
    %v1014 = vtanh.pop %v1004
    %v1015 = vmul.f32 %v1005, 0.5
    %v1016 = vtanh.pop %v1015
    %v1017 = vmul.f32 %v1016, 0.5
    %v1018 = vadd.f32 %v1017, 0.5
    %v1019 = vmul.f32 %v1013, %v909
    %v1020 = vmul.f32 %v1009, %v1014
    %v1021 = vadd.f32 %v1019, %v1020
    %v1022 = vtanh.pop %v1021
    %v1023 = vmul.f32 %v1018, %v1022
    %s1024 = scalar_lea.vmem [#allocation4], 112
    %v1025 = vld [vmem:[%s1024] sm:$0xff]
    %v1026 = vld [vmem:[%s1024 + $0x8] sm:$0xff]
    %v1027 = vunpack.c.l.bf16 %v1025
    %v1028 = vunpack.c.h.bf16 %v1025
    %v1029 = vunpack.c.l.bf16 %v1026
    %v1030 = vunpack.c.h.bf16 %v1026
    %v1031 = vpack.c.bf16 %v1023, %v1023
    %1032 = vmatprep.subr.bf16.mxu0 %v213
    %1033 = vmatpush1.bf16.msra.mxu0 %v212
    %1034 = vmatprep.subr.bf16.mxu0 %v209
    %1035 = vmatpush1.bf16.msra.mxu0 %v208
    %1036 = vmatprep.subr.bf16.mxu0 %v205
    %1037 = vmatpush1.bf16.msra.mxu0 %v204
    %1038 = vmatprep.subr.bf16.mxu0 %v201
    %1039 = vmatpush1.bf16.msra.mxu0 %v200
    %1040 = vmatprep.subr.bf16.mxu0 %v197
    %1041 = vmatpush1.bf16.msra.mxu0 %v196
    %1042 = vmatprep.subr.bf16.mxu0 %v193
    %1043 = vmatpush1.bf16.msra.mxu0 %v192
    %1044 = vmatprep.subr.bf16.mxu0 %v189
    %1045 = vmatpush1.bf16.msra.mxu0 %v188
    %1046 = vmatprep.subr.bf16.mxu0 %v185
    %1047 = vmatpush1.bf16.msra.mxu0 %v184
    %1048 = vmatprep.subr.bf16.mxu0 0
    %1049 = vmatpush2.bf16.msra.mxu0 0
    %1050 = vmatprep.subr.bf16.mxu0 0
    %1051 = vmatpush2.bf16.msra.mxu0 0
    %1052 = vmatprep.subr.bf16.mxu0 0
    %1053 = vmatpush2.bf16.msra.mxu0 0
    %1054 = vmatprep.subr.bf16.mxu0 0
    %1055 = vmatpush2.bf16.msra.mxu0 0
    %1056 = vmatprep.subr.bf16.mxu0 0
    %1057 = vmatpush2.bf16.msra.mxu0 0
    %1058 = vmatprep.subr.bf16.mxu0 0
    %1059 = vmatpush2.bf16.msra.mxu0 0
    %1060 = vmatprep.subr.bf16.mxu0 0
    %1061 = vmatpush2.bf16.msra.mxu0 0
    %1062 = vmatprep.subr.bf16.mxu0 0
    %1063 = vmatpush2.bf16.msra.mxu0 0
    %1064 = vmatprep.mubr.bf16.mxu0 0
    %1065 = vmatmul.mubr.bf16.gmra.mxu0 %v1031
    %v1066 = vpop.f32.mrf.mxu0
    %v1067 = vadd.f32 0.0, %v1066
    %v1068 = vpop.f32.mrf.mxu0
    %v1069 = vadd.f32 0.0, %v1068
    %v1070 = vpop.f32.mrf.mxu0
    %v1071 = vpop.f32.mrf.mxu0
    %1072 = vdwg.mxu0
    %1073 = vmatprep.subr.bf16.mxu0 %v215
    %1074 = vmatpush1.bf16.msra.mxu0 %v214
    %1075 = vmatprep.subr.bf16.mxu0 %v211
    %1076 = vmatpush1.bf16.msra.mxu0 %v210
    %1077 = vmatprep.subr.bf16.mxu0 %v207
    %1078 = vmatpush1.bf16.msra.mxu0 %v206
    %1079 = vmatprep.subr.bf16.mxu0 %v203
    %1080 = vmatpush1.bf16.msra.mxu0 %v202
    %1081 = vmatprep.subr.bf16.mxu0 %v199
    %1082 = vmatpush1.bf16.msra.mxu0 %v198
    %1083 = vmatprep.subr.bf16.mxu0 %v195
    %1084 = vmatpush1.bf16.msra.mxu0 %v194
    %1085 = vmatprep.subr.bf16.mxu0 %v191
    %1086 = vmatpush1.bf16.msra.mxu0 %v190
    %1087 = vmatprep.subr.bf16.mxu0 %v187
    %1088 = vmatpush1.bf16.msra.mxu0 %v186
    %1089 = vmatprep.subr.bf16.mxu0 0
    %1090 = vmatpush2.bf16.msra.mxu0 0
    %1091 = vmatprep.subr.bf16.mxu0 0
    %1092 = vmatpush2.bf16.msra.mxu0 0
    %1093 = vmatprep.subr.bf16.mxu0 0
    %1094 = vmatpush2.bf16.msra.mxu0 0
    %1095 = vmatprep.subr.bf16.mxu0 0
    %1096 = vmatpush2.bf16.msra.mxu0 0
    %1097 = vmatprep.subr.bf16.mxu0 0
    %1098 = vmatpush2.bf16.msra.mxu0 0
    %1099 = vmatprep.subr.bf16.mxu0 0
    %1100 = vmatpush2.bf16.msra.mxu0 0
    %1101 = vmatprep.subr.bf16.mxu0 0
    %1102 = vmatpush2.bf16.msra.mxu0 0
    %1103 = vmatprep.subr.bf16.mxu0 0
    %1104 = vmatpush2.bf16.msra.mxu0 0
    %1105 = vmatprep.mubr.bf16.mxu0 0
    %1106 = vmatmul.mubr.bf16.gmra.mxu0 %v1031
    %v1107 = vpop.f32.mrf.mxu0
    %v1108 = vadd.f32 0.0, %v1107
    %v1109 = vpop.f32.mrf.mxu0
    %v1110 = vadd.f32 0.0, %v1109
    %v1111 = vpop.f32.mrf.mxu0
    %v1112 = vpop.f32.mrf.mxu0
    %1113 = vdwg.mxu0
    %v1114 = vadd.f32 %v1027, %v1067
    %v1115 = vadd.f32 %v1028, %v1069
    %v1116 = vadd.f32 %v1029, %v1108
    %v1117 = vadd.f32 %v1030, %v1110
    %v1118 = vmul.f32 %v1114, 0.5
    %v1119 = vtanh.pop %v1118
    %v1120 = vmul.f32 %v1119, 0.5
    %v1121 = vadd.f32 %v1120, 0.5
    %v1122 = vmul.f32 %v1115, 0.5
    %v1123 = vtanh.pop %v1122
    %v1124 = vmul.f32 %v1123, 0.5
    %v1125 = vadd.f32 %v1124, 0.5
    %v1126 = vtanh.pop %v1116
    %v1127 = vmul.f32 %v1117, 0.5
    %v1128 = vtanh.pop %v1127
    %v1129 = vmul.f32 %v1128, 0.5
    %v1130 = vadd.f32 %v1129, 0.5
    %v1131 = vmul.f32 %v1125, %v1021
    %v1132 = vmul.f32 %v1121, %v1126
    %v1133 = vadd.f32 %v1131, %v1132
    %v1134 = vtanh.pop %v1133
    %v1135 = vmul.f32 %v1130, %v1134
    %1136 = vst [vmem:[#allocation2] sm:$0xff] %v1135
    %1137 = vst [vmem:[#allocation3] sm:$0xff] %v1133
    // Predicated region
    $region22: #{tpu_custom_call.1} parent=1 // pred_check
      %p1138 = pneg %p41
    $region23: #{tpu_custom_call.1} parent=1 // pred_check_branch
      %1140 = sbr.rel (%p1138) target = $region25
    $region24: #{tpu_custom_call.1} parent=1 // pred_region
      %1141 = vst [vmem:[#allocation9] sm:$0xff] %v1135
    $region25: #{tpu_custom_call.1} parent=1 // pred_fallthru
      _
    // Predicated region
    $region26: #{tpu_custom_call.1} parent=1 // pred_check
      _
    $region27: #{tpu_custom_call.1} parent=1 // pred_check_branch
      %1143 = sbr.rel (0) target = $region29
    $region28: #{tpu_custom_call.1} parent=1 // pred_region
      %s1145 = ssub.s32 128, 128
      %1146 = vsyncadd [#allocation6], %s1145
      %s1148 = sshll.u32 [#allocation9], 4
      %s1149 = int_to_ptr.vmem [resolvable:$true] %s1148
      %1151 = dma.vmem_to_hbm [thread:$0]  %s1149, 128, %s2, [#allocation6]
    $region29: #{tpu_custom_call.1} parent=1 // pred_fallthru
      _
    // Predicated region
    $region30: #{tpu_custom_call.1} parent=1 // pred_check
      _
    $region31: #{tpu_custom_call.1} parent=1 // pred_check_branch
      %1153 = sbr.rel (0) target = $region33
    $region32: #{tpu_custom_call.1} parent=1 // pred_region
      %1154 = dma.done [#allocation6], 128
    $region33: #{tpu_custom_call.1} parent=1 // pred_fallthru
      _
    %1155 = vsyncpa [#allocation5], 1
    %1156 = vsyncpa [#allocation8], 1
    %1157 = vsyncpa [#allocation6], 1

</llo_original>
